<compile_context>
chip_gen: v6e
topology: v6e:2x2x1
jax: 0.10.0
libtpu: 0.0.40
codegen_flags: <defaults>
</compile_context>

<pallas_src>
import math

import jax
import jax.numpy as jnp
from jax.experimental import pallas as pl
from jax.experimental.pallas import tpu as pltpu


_DIMS = (768, 512, 256, 128, 1)
_MAX_BLOCK_B = 2048   # rows per grid step; sweep 512-2048 on v5e/v6e if desired
_SMALL_B = 256        # below this, a single grid step is fine (megacore gain negligible)


def _round_up(n, m):
    return ((n + m - 1) // m) * m


def _gelu_tanh(x):
    # tanh-approx GELU: ~6 VALU ops + one EUP tanh per element.
    # |error vs exact-erf GELU| <~ 1e-3 absolute (accepted numerics contract, see asserts).
    c = math.sqrt(2.0 / math.pi)
    return 0.5 * x * (1.0 + jnp.tanh(c * (x + 0.044715 * (x * x * x))))


def regression_head_kernel(x_ref,
                           w1_ref, b1_ref,
                           w2_ref, b2_ref,
                           w3_ref, b3_ref,
                           w4_row_ref, b4_ref,
                           o_ref):
    # Whole MLP in one kernel: 3 MXU matmuls (bf16 operands, f32 accumulate), bias-add +
    # tanh-GELU in f32 on the VPU/EUP, and a VPU/XLU lane reduction for the 128 -> 1 head.
    x = x_ref[...]                                                   # (bb, 768) bf16

    h = jnp.dot(x, w1_ref[...], preferred_element_type=jnp.float32) + b1_ref[...]
    h = _gelu_tanh(h)

    h = jnp.dot(h.astype(jnp.bfloat16), w2_ref[...],
                preferred_element_type=jnp.float32) + b2_ref[...]
    h = _gelu_tanh(h)

    h = jnp.dot(h.astype(jnp.bfloat16), w3_ref[...],
                preferred_element_type=jnp.float32) + b3_ref[...]
    h = _gelu_tanh(h)

    # 128 -> 1: elementwise multiply by the broadcast weight row + lane reduction
    # (avoids an N=1 MXU matmul that would use 1/256 of the MXU for almost no work).
    out = jnp.sum(h * w4_row_ref[...], axis=-1, keepdims=True) + b4_ref[...]
    o_ref[...] = out.astype(o_ref.dtype)


def init_params(key, in_features=768):
    """Deterministic init mimicking PyTorch nn.Linear (uniform(-1/sqrt(fan_in), ...)).

    Weights are stored transposed vs. PyTorch, i.e. (fan_in, fan_out), so y = x @ W + b.
    """
    dims = [in_features, 512, 256, 128, 1]
    params = []
    for fan_in, fan_out in zip(dims[:-1], dims[1:]):
        key, kw, kb = jax.random.split(key, 3)
        bound = 1.0 / math.sqrt(fan_in)
        w = jax.random.uniform(kw, (fan_in, fan_out), jnp.float32, -bound, bound)
        b = jax.random.uniform(kb, (1, fan_out), jnp.float32, -bound, bound)
        params.append((w, b))
    return params


def prepare_params(params):
    """One-time conversion to the kernel layout (outside the hot loop).

    w1..w3 -> bf16 (MXU operands), biases stay f32, final layer kept as an f32
    (1, 128) row + (1, 1) bias for the VPU reduction.
    """
    (w1, b1), (w2, b2), (w3, b3), (w4, b4) = params
    return (
        (w1.astype(jnp.bfloat16), b1.astype(jnp.float32)),
        (w2.astype(jnp.bfloat16), b2.astype(jnp.float32)),
        (w3.astype(jnp.bfloat16), b3.astype(jnp.float32)),
        (jnp.reshape(w4.astype(jnp.float32), (1, w4.shape[0])),
         jnp.reshape(b4.astype(jnp.float32), (1, 1))),
    )


def _replicated_spec(arr):
    """Constant-block-index spec for weights/biases; single-buffered when supported."""
    idx_map = lambda i, _nd=arr.ndim: (0,) * _nd
    try:
        # Constant index map -> no re-DMA across steps; request a single VMEM buffer.
        return pl.BlockSpec(arr.shape, idx_map, pipeline_mode=pl.Buffered(1))
    except (TypeError, ValueError, AttributeError):
        return pl.BlockSpec(arr.shape, idx_map)


def _default_block_b(B):
    if B <= _SMALL_B:
        return B
    # >= 2 grid steps so the "parallel" batch axis shards across both v7x TensorCores
    # and the BlockSpec pipeline has something to double-buffer against.
    return min(_MAX_BLOCK_B, _round_up(pl.cdiv(B, 2), 128))


def regression_head(x, prepared_params, *, block_b=None):
    """Apply the regression head. x: (B, 768) float/bf16. Returns (B, 1) float32."""
    (w1, b1), (w2, b2), (w3, b3), (w4r, b4) = prepared_params
    B, F = x.shape

    # Halve the dominant HBM read: feed x as bf16 (producers should ideally emit bf16).
    x_bf16 = x if x.dtype == jnp.bfloat16 else x.astype(jnp.bfloat16)

    if block_b is None:
        block_b = _default_block_b(B)
    block_b = min(block_b, B)
    if block_b != B and block_b % 16 != 0:
        raise ValueError("block_b must equal B or be a multiple of 16 "
                         "(bf16 sublane tiling constraint)")

    grid = (pl.cdiv(B, block_b),)

    in_specs = [
        pl.BlockSpec((block_b, F), lambda i: (i, 0)),   # x tiles along batch
        _replicated_spec(w1), _replicated_spec(b1),
        _replicated_spec(w2), _replicated_spec(b2),
        _replicated_spec(w3), _replicated_spec(b3),
        _replicated_spec(w4r), _replicated_spec(b4),
    ]
    out_specs = pl.BlockSpec((block_b, 1), lambda i: (i, 0))

    # Explicit VMEM budget from the actual footprint: single-buffered weights,
    # double-buffered bf16 x tile + tiny output tile, f32/bf16 activation temporaries,
    # plus headroom.  Clamped <= 40 MiB (comfortably under v7x's 64 MiB physical VMEM).
    weight_bytes = sum(int(a.size) * jnp.dtype(a.dtype).itemsize
                       for a in (w1, b1, w2, b2, w3, b3, w4r, b4))
    x_tile_bytes = block_b * F * 2                       # bf16
    out_tile_bytes = block_b * 4
    act_bytes = block_b * sum(_DIMS[1:4]) * (4 + 2)      # f32 temps + bf16 matmul copies
    vmem_limit = (2 * weight_bytes + 2 * x_tile_bytes + 2 * out_tile_bytes
                  + act_bytes + (4 << 20))
    vmem_limit = int(min(max(vmem_limit, 16 << 20), 40 << 20))

    return pl.pallas_call(
        regression_head_kernel,
        out_shape=jax.ShapeDtypeStruct((B, 1), jnp.float32),
        grid_spec=pltpu.PrefetchScalarGridSpec(
            num_scalar_prefetch=0,
            grid=grid,
            in_specs=in_specs,
            out_specs=out_specs,
        ),
        compiler_params=pltpu.CompilerParams(
            dimension_semantics=("parallel",),
            vmem_limit_bytes=vmem_limit,
        ),
    )(x_bf16, w1, b1, w2, b2, w3, b3, w4r, b4)


def reference_f32(x, params):
    """Full-f32 reference with exact-erf GELU (PyTorch nn.GELU() default semantics)."""
    h = x
    for i, (w, b) in enumerate(params):
        h = h @ w + b
        if i < len(params) - 1:
            h = jax.nn.gelu(h, approximate=False)
    return h


def reference_mixed(x, prepared_params):
    """Mirrors the kernel numerics (bf16 matmul operands, f32 accumulate, tanh GELU)."""
    (w1, b1), (w2, b2), (w3, b3), (w4r, b4) = prepared_params
    h = jnp.dot(x.astype(jnp.bfloat16), w1, preferred_element_type=jnp.float32) + b1
    h = _gelu_tanh(h)
    h = jnp.dot(h.astype(jnp.bfloat16), w2, preferred_element_type=jnp.float32) + b2
    h = _gelu_tanh(h)
    h = jnp.dot(h.astype(jnp.bfloat16), w3, preferred_element_type=jnp.float32) + b3
    h = _gelu_tanh(h)
    return jnp.sum(h * w4r, axis=-1, keepdims=True) + b4


if __name__ == "__main__":
    key = jax.random.PRNGKey(0)
    kx, kp = jax.random.split(key)

    B, F = 8, 768
    x = jax.random.normal(kx, (B, F), dtype=jnp.float32)
    params = init_params(kp, in_features=F)
    prepared = prepare_params(params)   # one-time weight prep (resident across calls)

    out = regression_head(x, prepared)
    out = jax.block_until_ready(out)

    ref_mix = reference_mixed(x, prepared)   # same bf16/f32/tanh numerics as the kernel
    ref_f32 = reference_f32(x, params)       # exact-GELU full-precision sanity check

    assert out.shape == (B, 1), out.shape
    assert jnp.allclose(out, ref_mix, atol=5e-3, rtol=5e-3), (
        float(jnp.max(jnp.abs(out - ref_mix))))
    assert jnp.allclose(out, ref_f32, atol=5e-2, rtol=5e-2), (
        float(jnp.max(jnp.abs(out - ref_f32))))

    print("KERNEL_OK")
</pallas_src>

<mosaic_0001>
module attributes {stable_mosaic.version = 11 : i64} {
  func.func @regression_head_kernel(%arg0: i32, %arg1: memref<8x768xbf16, #tpu.memory_space<vmem>>, %arg2: memref<768x512xbf16, #tpu.memory_space<vmem>>, %arg3: memref<1x512xf32, #tpu.memory_space<vmem>>, %arg4: memref<512x256xbf16, #tpu.memory_space<vmem>>, %arg5: memref<1x256xf32, #tpu.memory_space<vmem>>, %arg6: memref<256x128xbf16, #tpu.memory_space<vmem>>, %arg7: memref<1x128xf32, #tpu.memory_space<vmem>>, %arg8: memref<1x128xf32, #tpu.memory_space<vmem>>, %arg9: memref<1x1xf32, #tpu.memory_space<vmem>>, %arg10: memref<8x1xf32, #tpu.memory_space<vmem>>) attributes {dimension_semantics = [#tpu.dimension_semantics<parallel>], iteration_bounds = array<i64: 1>, scalar_prefetch = 0 : i64, scratch_operands = 0 : i64, tpu.core_type = #tpu.core_type<tc>, window_params = [{transform_indices = @transform_0, window_bounds = array<i64: 8, 768>}, {pipeline_mode = #tpu.pipeline_mode<synchronous>, transform_indices = @transform_1, window_bounds = array<i64: 768, 512>}, {pipeline_mode = #tpu.pipeline_mode<synchronous>, transform_indices = @transform_2, window_bounds = array<i64: 1, 512>}, {pipeline_mode = #tpu.pipeline_mode<synchronous>, transform_indices = @transform_3, window_bounds = array<i64: 512, 256>}, {pipeline_mode = #tpu.pipeline_mode<synchronous>, transform_indices = @transform_4, window_bounds = array<i64: 1, 256>}, {pipeline_mode = #tpu.pipeline_mode<synchronous>, transform_indices = @transform_5, window_bounds = array<i64: 256, 128>}, {pipeline_mode = #tpu.pipeline_mode<synchronous>, transform_indices = @transform_6, window_bounds = array<i64: 1, 128>}, {pipeline_mode = #tpu.pipeline_mode<synchronous>, transform_indices = @transform_7, window_bounds = array<i64: 1, 128>}, {pipeline_mode = #tpu.pipeline_mode<synchronous>, transform_indices = @transform_8, window_bounds = array<i64: 1, 1>}, {transform_indices = @transform_9, window_bounds = array<i64: 8, 1>}]} {
    %c0 = arith.constant 0 : index
    %c0_0 = arith.constant 0 : index
    %0 = vector.load %arg1[%c0, %c0_0] : memref<8x768xbf16, #tpu.memory_space<vmem>>, vector<8x768xbf16>
    %c0_1 = arith.constant 0 : index
    %c0_2 = arith.constant 0 : index
    %1 = vector.load %arg2[%c0_1, %c0_2] : memref<768x512xbf16, #tpu.memory_space<vmem>>, vector<768x512xbf16>
    %cst = arith.constant dense<0.000000e+00> : vector<8x512xf32>
    %2 = tpu.matmul %0, %1, %cst {dimension_numbers = #tpu.dot_dimension_numbers<[1], [0], [0], [1], [0, 0, 1, 1], [], []>} : vector<8x768xbf16>, vector<768x512xbf16>, vector<8x512xf32> -> vector<8x512xf32>
    %c0_3 = arith.constant 0 : index
    %c0_4 = arith.constant 0 : index
    %3 = vector.load %arg3[%c0_3, %c0_4] : memref<1x512xf32, #tpu.memory_space<vmem>>, vector<1x512xf32>
    %4 = vector.broadcast %3 : vector<1x512xf32> to vector<8x512xf32>
    %5 = arith.addf %2, %4 : vector<8x512xf32>
    %cst_5 = arith.constant 5.000000e-01 : f32
    %6 = vector.broadcast %cst_5 : f32 to vector<8x512xf32>
    %7 = arith.mulf %6, %5 : vector<8x512xf32>
    %8 = arith.mulf %5, %5 : vector<8x512xf32>
    %9 = arith.mulf %8, %5 : vector<8x512xf32>
    %cst_6 = arith.constant 4.471500e-02 : f32
    %10 = vector.broadcast %cst_6 : f32 to vector<8x512xf32>
    %11 = arith.mulf %10, %9 : vector<8x512xf32>
    %12 = arith.addf %5, %11 : vector<8x512xf32>
    %cst_7 = arith.constant 0.797884583 : f32
    %13 = vector.broadcast %cst_7 : f32 to vector<8x512xf32>
    %14 = arith.mulf %13, %12 : vector<8x512xf32>
    %15 = math.tanh %14 : vector<8x512xf32>
    %cst_8 = arith.constant 1.000000e+00 : f32
    %16 = vector.broadcast %cst_8 : f32 to vector<8x512xf32>
    %17 = arith.addf %16, %15 : vector<8x512xf32>
    %18 = arith.mulf %7, %17 : vector<8x512xf32>
    %19 = arith.truncf %18 : vector<8x512xf32> to vector<8x512xbf16>
    %c0_9 = arith.constant 0 : index
    %c0_10 = arith.constant 0 : index
    %20 = vector.load %arg4[%c0_9, %c0_10] : memref<512x256xbf16, #tpu.memory_space<vmem>>, vector<512x256xbf16>
    %cst_11 = arith.constant dense<0.000000e+00> : vector<8x256xf32>
    %21 = tpu.matmul %19, %20, %cst_11 {dimension_numbers = #tpu.dot_dimension_numbers<[1], [0], [0], [1], [0, 0, 1, 1], [], []>} : vector<8x512xbf16>, vector<512x256xbf16>, vector<8x256xf32> -> vector<8x256xf32>
    %c0_12 = arith.constant 0 : index
    %c0_13 = arith.constant 0 : index
    %22 = vector.load %arg5[%c0_12, %c0_13] : memref<1x256xf32, #tpu.memory_space<vmem>>, vector<1x256xf32>
    %23 = vector.broadcast %22 : vector<1x256xf32> to vector<8x256xf32>
    %24 = arith.addf %21, %23 : vector<8x256xf32>
    %cst_14 = arith.constant 5.000000e-01 : f32
    %25 = vector.broadcast %cst_14 : f32 to vector<8x256xf32>
    %26 = arith.mulf %25, %24 : vector<8x256xf32>
    %27 = arith.mulf %24, %24 : vector<8x256xf32>
    %28 = arith.mulf %27, %24 : vector<8x256xf32>
    %cst_15 = arith.constant 4.471500e-02 : f32
    %29 = vector.broadcast %cst_15 : f32 to vector<8x256xf32>
    %30 = arith.mulf %29, %28 : vector<8x256xf32>
    %31 = arith.addf %24, %30 : vector<8x256xf32>
    %cst_16 = arith.constant 0.797884583 : f32
    %32 = vector.broadcast %cst_16 : f32 to vector<8x256xf32>
    %33 = arith.mulf %32, %31 : vector<8x256xf32>
    %34 = math.tanh %33 : vector<8x256xf32>
    %cst_17 = arith.constant 1.000000e+00 : f32
    %35 = vector.broadcast %cst_17 : f32 to vector<8x256xf32>
    %36 = arith.addf %35, %34 : vector<8x256xf32>
    %37 = arith.mulf %26, %36 : vector<8x256xf32>
    %38 = arith.truncf %37 : vector<8x256xf32> to vector<8x256xbf16>
    %c0_18 = arith.constant 0 : index
    %c0_19 = arith.constant 0 : index
    %39 = vector.load %arg6[%c0_18, %c0_19] : memref<256x128xbf16, #tpu.memory_space<vmem>>, vector<256x128xbf16>
    %cst_20 = arith.constant dense<0.000000e+00> : vector<8x128xf32>
    %40 = tpu.matmul %38, %39, %cst_20 {dimension_numbers = #tpu.dot_dimension_numbers<[1], [0], [0], [1], [0, 0, 1, 1], [], []>} : vector<8x256xbf16>, vector<256x128xbf16>, vector<8x128xf32> -> vector<8x128xf32>
    %c0_21 = arith.constant 0 : index
    %c0_22 = arith.constant 0 : index
    %41 = vector.load %arg7[%c0_21, %c0_22] : memref<1x128xf32, #tpu.memory_space<vmem>>, vector<1x128xf32>
    %42 = vector.broadcast %41 : vector<1x128xf32> to vector<8x128xf32>
    %43 = arith.addf %40, %42 : vector<8x128xf32>
    %cst_23 = arith.constant 5.000000e-01 : f32
    %44 = vector.broadcast %cst_23 : f32 to vector<8x128xf32>
    %45 = arith.mulf %44, %43 : vector<8x128xf32>
    %46 = arith.mulf %43, %43 : vector<8x128xf32>
    %47 = arith.mulf %46, %43 : vector<8x128xf32>
    %cst_24 = arith.constant 4.471500e-02 : f32
    %48 = vector.broadcast %cst_24 : f32 to vector<8x128xf32>
    %49 = arith.mulf %48, %47 : vector<8x128xf32>
    %50 = arith.addf %43, %49 : vector<8x128xf32>
    %cst_25 = arith.constant 0.797884583 : f32
    %51 = vector.broadcast %cst_25 : f32 to vector<8x128xf32>
    %52 = arith.mulf %51, %50 : vector<8x128xf32>
    %53 = math.tanh %52 : vector<8x128xf32>
    %cst_26 = arith.constant 1.000000e+00 : f32
    %54 = vector.broadcast %cst_26 : f32 to vector<8x128xf32>
    %55 = arith.addf %54, %53 : vector<8x128xf32>
    %56 = arith.mulf %45, %55 : vector<8x128xf32>
    %c0_27 = arith.constant 0 : index
    %c0_28 = arith.constant 0 : index
    %57 = vector.load %arg8[%c0_27, %c0_28] : memref<1x128xf32, #tpu.memory_space<vmem>>, vector<1x128xf32>
    %58 = vector.broadcast %57 : vector<1x128xf32> to vector<8x128xf32>
    %59 = arith.mulf %56, %58 : vector<8x128xf32>
    %cst_29 = arith.constant dense<0.000000e+00> : vector<8xf32>
    %60 = vector.multi_reduction <add>, %59, %cst_29 [1] : vector<8x128xf32> to vector<8xf32>
    %61 = vector.shape_cast %60 : vector<8xf32> to vector<8x1xf32>
    %c0_30 = arith.constant 0 : index
    %c0_31 = arith.constant 0 : index
    %62 = vector.load %arg9[%c0_30, %c0_31] : memref<1x1xf32, #tpu.memory_space<vmem>>, vector<1x1xf32>
    %63 = vector.broadcast %62 : vector<1x1xf32> to vector<8x1xf32>
    %64 = arith.addf %61, %63 : vector<8x1xf32>
    %c0_32 = arith.constant 0 : index
    %c0_33 = arith.constant 0 : index
    %65 = vector.load %arg10[%c0_32, %c0_33] : memref<8x1xf32, #tpu.memory_space<vmem>>, vector<8x1xf32>
    tpu.vector_store %arg10[%c0_32, %c0_33], %64 {strides = array<i32>} : memref<8x1xf32, #tpu.memory_space<vmem>>, vector<8x1xf32>,
    return
  }
  func.func @transform_0(%arg0: i32) -> (i32, i32) {
    %c0_i32 = arith.constant 0 : i32
    %c0_i32_0 = arith.constant 0 : i32
    return %arg0, %c0_i32 : i32, i32
  }
  func.func @transform_1(%arg0: i32) -> (i32, i32) {
    %c0_i32 = arith.constant 0 : i32
    %c0_i32_0 = arith.constant 0 : i32
    %c0_i32_1 = arith.constant 0 : i32
    return %c0_i32, %c0_i32_0 : i32, i32
  }
  func.func @transform_2(%arg0: i32) -> (i32, i32) {
    %c0_i32 = arith.constant 0 : i32
    %c0_i32_0 = arith.constant 0 : i32
    %c0_i32_1 = arith.constant 0 : i32
    return %c0_i32, %c0_i32_0 : i32, i32
  }
  func.func @transform_3(%arg0: i32) -> (i32, i32) {
    %c0_i32 = arith.constant 0 : i32
    %c0_i32_0 = arith.constant 0 : i32
    %c0_i32_1 = arith.constant 0 : i32
    return %c0_i32, %c0_i32_0 : i32, i32
  }
  func.func @transform_4(%arg0: i32) -> (i32, i32) {
    %c0_i32 = arith.constant 0 : i32
    %c0_i32_0 = arith.constant 0 : i32
    %c0_i32_1 = arith.constant 0 : i32
    return %c0_i32, %c0_i32_0 : i32, i32
  }
  func.func @transform_5(%arg0: i32) -> (i32, i32) {
    %c0_i32 = arith.constant 0 : i32
    %c0_i32_0 = arith.constant 0 : i32
    %c0_i32_1 = arith.constant 0 : i32
    return %c0_i32, %c0_i32_0 : i32, i32
  }
  func.func @transform_6(%arg0: i32) -> (i32, i32) {
    %c0_i32 = arith.constant 0 : i32
    %c0_i32_0 = arith.constant 0 : i32
    %c0_i32_1 = arith.constant 0 : i32
    return %c0_i32, %c0_i32_0 : i32, i32
  }
  func.func @transform_7(%arg0: i32) -> (i32, i32) {
    %c0_i32 = arith.constant 0 : i32
    %c0_i32_0 = arith.constant 0 : i32
    %c0_i32_1 = arith.constant 0 : i32
    return %c0_i32, %c0_i32_0 : i32, i32
  }
  func.func @transform_8(%arg0: i32) -> (i32, i32) {
    %c0_i32 = arith.constant 0 : i32
    %c0_i32_0 = arith.constant 0 : i32
    %c0_i32_1 = arith.constant 0 : i32
    return %c0_i32, %c0_i32_0 : i32, i32
  }
  func.func @transform_9(%arg0: i32) -> (i32, i32) {
    %c0_i32 = arith.constant 0 : i32
    %c0_i32_0 = arith.constant 0 : i32
    return %arg0, %c0_i32 : i32, i32
  }
}

</mosaic_0001>

<llo_original>
// kernel: tpu_custom_call.1
$region0: #{tpu_custom_call.1}
  #allocation0 [shape = 'u32[]', space=smem, size = 0x4, offset = 0x4, fixed_abs, tag = 'smem constant byte address 0x4 - core index']
  #allocation1 [shape = 'u32[144,128]{1,0:T(1,128)}', space=vmem, size = 0x12000, scoped, tag = 'internal scratch']
  #allocation2 [shape = 'f32[1,1]{1,0:T(1,128)S(1)}', space=vmem, size = 0x200, scoped, tag = 'scoped memory for tpu_custom_call.1']
  %s0 = inlined_call_operand.hbm [shape: bf16[8,768], index: 0, kind: input, shape index: {}]
  %s1 = inlined_call_operand.hbm [shape: bf16[768,512], index: 1, kind: input, shape index: {}]
  %s2 = inlined_call_operand.vmem [shape: f32[1,512], index: 2, kind: input, shape index: {}]
  %s3 = inlined_call_operand.hbm [shape: bf16[512,256], index: 3, kind: input, shape index: {}]
  %s4 = inlined_call_operand.vmem [shape: f32[1,256], index: 4, kind: input, shape index: {}]
  %s5 = inlined_call_operand.hbm [shape: bf16[256,128], index: 5, kind: input, shape index: {}]
  %s6 = inlined_call_operand.vmem [shape: f32[1,128], index: 6, kind: input, shape index: {}]
  %s7 = inlined_call_operand.vmem [shape: f32[1,128], index: 7, kind: input, shape index: {}]
  %s8 = inlined_call_operand.<no memory space> [shape: f32[1,1], index: 8, kind: input, shape index: {}]
  %s9 = inlined_call_operand.vmem [shape: f32[8,1], index: 9, kind: output, shape index: {}]
  %s10 = sld [smem:[#allocation0]]
  $region62: #{tpu_custom_call.1} parent=0
    _
  %s12 = ssub.s32 1, %s10
  %s13 = scalar_select 0, %s12, %s10
  %v14 = vstv %s8
  %15 = vst [vmem:[#allocation2] sm:$0x1] %v14
  $region1: #{tpu_custom_call.1} parent=0
    #allocation3 [shape = 'u8[12288]{0}', space=vmem, size = 0x3000, scoped, tag = 'input window, operand 0, single buffered']
    #allocation4 [shape = 's32[1]{0}', space=sflag, size = 0x4, scoped, tag = 'scoped memory for tpu_custom_call.1']
    #allocation5 [shape = 'u8[786432]{0}', space=vmem, size = 0xc0000, scoped, tag = 'input window, operand 1, single buffered']
    #allocation6 [shape = 's32[1]{0}', space=sflag, size = 0x4, scoped, tag = 'scoped memory for tpu_custom_call.1']
    #allocation7 [shape = 'u8[262144]{0}', space=vmem, size = 0x40000, scoped, tag = 'input window, operand 3, single buffered']
    #allocation8 [shape = 'u8[65536]{0}', space=vmem, size = 0x10000, scoped, tag = 'input window, operand 5, single buffered']
    #allocation9 [shape = 's32[1]{0}', space=sflag, size = 0x4, scoped, tag = 'scoped memory for tpu_custom_call.1']
    %16 = vsyncpa [#allocation4], 0
    %17 = vsyncpa [#allocation6], 0
    %18 = vsyncpa [#allocation9], 0
    // Predicated region
    $region2: #{tpu_custom_call.1} parent=1 // pred_check
      _
    $region3: #{tpu_custom_call.1} parent=1 // pred_check_branch
      %20 = sbr.rel (0) target = $region5
    $region4: #{tpu_custom_call.1} parent=1 // pred_region
      %s22 = ssub.s32 384, 384
      %23 = vsyncadd [#allocation4], %s22
      %s25 = sshll.u32 [#allocation3], 4
      %s26 = int_to_ptr.vmem [resolvable:$true] %s25
      %28 = dma.hbm_to_vmem [thread:$0]  %s0, 384, %s26, [#allocation4]
    $region5: #{tpu_custom_call.1} parent=1 // pred_fallthru
      _
    // Predicated region
    $region6: #{tpu_custom_call.1} parent=1 // pred_check
      _
    $region7: #{tpu_custom_call.1} parent=1 // pred_check_branch
      %30 = sbr.rel (0) target = $region9
    $region8: #{tpu_custom_call.1} parent=1 // pred_region
      %s32 = ssub.s32 24576, 24576
      %33 = vsyncadd [#allocation6], %s32
      %s34 = sshll.u32 [#allocation5], 4
      %s35 = int_to_ptr.vmem [resolvable:$true] %s34
      %40 = dma.hbm_to_vmem [thread:$0]  %s1, 24576, %s35, [#allocation6], 256, 256, 16
    $region9: #{tpu_custom_call.1} parent=1 // pred_fallthru
      _
    // Predicated region
    $region10: #{tpu_custom_call.1} parent=1 // pred_check
      _
    $region11: #{tpu_custom_call.1} parent=1 // pred_check_branch
      %42 = sbr.rel (0) target = $region13
    $region12: #{tpu_custom_call.1} parent=1 // pred_region
      _
    $region13: #{tpu_custom_call.1} parent=1 // pred_fallthru
      _
    // Predicated region
    $region14: #{tpu_custom_call.1} parent=1 // pred_check
      _
    $region15: #{tpu_custom_call.1} parent=1 // pred_check_branch
      %44 = sbr.rel (0) target = $region17
    $region16: #{tpu_custom_call.1} parent=1 // pred_region
      %s46 = ssub.s32 8192, 8192
      %47 = vsyncadd [#allocation6], %s46
      %s48 = sshll.u32 [#allocation7], 4
      %s49 = int_to_ptr.vmem [resolvable:$true] %s48
      %54 = dma.hbm_to_vmem [thread:$0]  %s3, 8192, %s49, [#allocation6], 128, 128, 8
    $region17: #{tpu_custom_call.1} parent=1 // pred_fallthru
      _
    // Predicated region
    $region18: #{tpu_custom_call.1} parent=1 // pred_check
      _
    $region19: #{tpu_custom_call.1} parent=1 // pred_check_branch
      %56 = sbr.rel (0) target = $region21
    $region20: #{tpu_custom_call.1} parent=1 // pred_region
      _
    $region21: #{tpu_custom_call.1} parent=1 // pred_fallthru
      _
    // Predicated region
    $region22: #{tpu_custom_call.1} parent=1 // pred_check
      _
    $region23: #{tpu_custom_call.1} parent=1 // pred_check_branch
      %58 = sbr.rel (0) target = $region25
    $region24: #{tpu_custom_call.1} parent=1 // pred_region
      %s60 = ssub.s32 2048, 2048
      %61 = vsyncadd [#allocation9], %s60
      %s62 = sshll.u32 [#allocation8], 4
      %s63 = int_to_ptr.vmem [resolvable:$true] %s62
      %68 = dma.hbm_to_vmem [thread:$0]  %s5, 2048, %s63, [#allocation9], 64, 64, 4
    $region25: #{tpu_custom_call.1} parent=1 // pred_fallthru
      _
    // Predicated region
    $region26: #{tpu_custom_call.1} parent=1 // pred_check
      _
    $region27: #{tpu_custom_call.1} parent=1 // pred_check_branch
      %70 = sbr.rel (0) target = $region29
    $region28: #{tpu_custom_call.1} parent=1 // pred_region
      _
    $region29: #{tpu_custom_call.1} parent=1 // pred_fallthru
      _
    // Predicated region
    $region30: #{tpu_custom_call.1} parent=1 // pred_check
      _
    $region31: #{tpu_custom_call.1} parent=1 // pred_check_branch
      %72 = sbr.rel (0) target = $region33
    $region32: #{tpu_custom_call.1} parent=1 // pred_region
      _
    $region33: #{tpu_custom_call.1} parent=1 // pred_fallthru
      _
    // Predicated region
    $region34: #{tpu_custom_call.1} parent=1 // pred_check
      _
    $region35: #{tpu_custom_call.1} parent=1 // pred_check_branch
      %74 = sbr.rel (0) target = $region37
    $region36: #{tpu_custom_call.1} parent=1 // pred_region
      _
    $region37: #{tpu_custom_call.1} parent=1 // pred_fallthru
      _
    // Predicated region
    $region38: #{tpu_custom_call.1} parent=1 // pred_check
      _
    $region39: #{tpu_custom_call.1} parent=1 // pred_check_branch
      %76 = sbr.rel (0) target = $region41
    $region40: #{tpu_custom_call.1} parent=1 // pred_region
      %77 = dma.done [#allocation4], 384
    $region41: #{tpu_custom_call.1} parent=1 // pred_fallthru
      _
    // Predicated region
    $region42: #{tpu_custom_call.1} parent=1 // pred_check
      _
    $region43: #{tpu_custom_call.1} parent=1 // pred_check_branch
      %79 = sbr.rel (0) target = $region45
    $region44: #{tpu_custom_call.1} parent=1 // pred_region
      %80 = dma.done [#allocation6], 24576
    $region45: #{tpu_custom_call.1} parent=1 // pred_fallthru
      _
    // Predicated region
    $region46: #{tpu_custom_call.1} parent=1 // pred_check
      _
    $region47: #{tpu_custom_call.1} parent=1 // pred_check_branch
      %82 = sbr.rel (0) target = $region49
    $region48: #{tpu_custom_call.1} parent=1 // pred_region
      %83 = dma.done [#allocation6], 8192
    $region49: #{tpu_custom_call.1} parent=1 // pred_fallthru
      _
    // Predicated region
    $region50: #{tpu_custom_call.1} parent=1 // pred_check
      _
    $region51: #{tpu_custom_call.1} parent=1 // pred_check_branch
      %85 = sbr.rel (0) target = $region53
    $region52: #{tpu_custom_call.1} parent=1 // pred_region
      %86 = dma.done [#allocation9], 2048
    $region53: #{tpu_custom_call.1} parent=1 // pred_fallthru
      _
    %v88 = vld [vmem:[#allocation3] sm:$0xff]
    %v89 = vld [vmem:[#allocation3 + $0x8] sm:$0xff]
    %v90 = vld [vmem:[#allocation3 + $0x10] sm:$0xff]
    %v91 = vld [vmem:[#allocation5] sm:$0xff]
    %v92 = vld [vmem:[#allocation5 + $0x8] sm:$0xff]
    %v93 = vld [vmem:[#allocation5 + $0x10] sm:$0xff]
    %v94 = vld [vmem:[#allocation5 + $0x18] sm:$0xff]
    %v95 = vld [vmem:[#allocation5 + $0x20] sm:$0xff]
    %v96 = vld [vmem:[#allocation5 + $0x28] sm:$0xff]
    %v97 = vld [vmem:[#allocation5 + $0x30] sm:$0xff]
    %v98 = vld [vmem:[#allocation5 + $0x38] sm:$0xff]
    %v99 = vld [vmem:[#allocation5 + $0x40] sm:$0xff]
    %v100 = vld [vmem:[#allocation5 + $0x48] sm:$0xff]
    %v101 = vld [vmem:[#allocation5 + $0x50] sm:$0xff]
    %v102 = vld [vmem:[#allocation5 + $0x58] sm:$0xff]
    %v103 = vld [vmem:[#allocation5 + $0x60] sm:$0xff]
    %v104 = vld [vmem:[#allocation5 + $0x68] sm:$0xff]
    %v105 = vld [vmem:[#allocation5 + $0x70] sm:$0xff]
    %v106 = vld [vmem:[#allocation5 + $0x78] sm:$0xff]
    %v107 = vld [vmem:[#allocation5 + $0x80] sm:$0xff]
    %v108 = vld [vmem:[#allocation5 + $0x88] sm:$0xff]
    %v109 = vld [vmem:[#allocation5 + $0x90] sm:$0xff]
    %v110 = vld [vmem:[#allocation5 + $0x98] sm:$0xff]
    %v111 = vld [vmem:[#allocation5 + $0xa0] sm:$0xff]
    %v112 = vld [vmem:[#allocation5 + $0xa8] sm:$0xff]
    %v113 = vld [vmem:[#allocation5 + $0xb0] sm:$0xff]
    %v114 = vld [vmem:[#allocation5 + $0xb8] sm:$0xff]
    %v115 = vld [vmem:[#allocation5 + $0xc0] sm:$0xff]
    %v116 = vld [vmem:[#allocation5 + $0xc8] sm:$0xff]
    %v117 = vld [vmem:[#allocation5 + $0xd0] sm:$0xff]
    %v118 = vld [vmem:[#allocation5 + $0xd8] sm:$0xff]
    %v119 = vld [vmem:[#allocation5 + $0xe0] sm:$0xff]
    %v120 = vld [vmem:[#allocation5 + $0xe8] sm:$0xff]
    %v121 = vld [vmem:[#allocation5 + $0xf0] sm:$0xff]
    %v122 = vld [vmem:[#allocation5 + $0xf8] sm:$0xff]
    %v123 = vld [vmem:[#allocation5 + $0x100] sm:$0xff]
    %v124 = vld [vmem:[#allocation5 + $0x108] sm:$0xff]
    %v125 = vld [vmem:[#allocation5 + $0x110] sm:$0xff]
    %v126 = vld [vmem:[#allocation5 + $0x118] sm:$0xff]
    %v127 = vld [vmem:[#allocation5 + $0x120] sm:$0xff]
    %v128 = vld [vmem:[#allocation5 + $0x128] sm:$0xff]
    %v129 = vld [vmem:[#allocation5 + $0x130] sm:$0xff]
    %v130 = vld [vmem:[#allocation5 + $0x138] sm:$0xff]
    %v131 = vld [vmem:[#allocation5 + $0x140] sm:$0xff]
    %v132 = vld [vmem:[#allocation5 + $0x148] sm:$0xff]
    %v133 = vld [vmem:[#allocation5 + $0x150] sm:$0xff]
    %v134 = vld [vmem:[#allocation5 + $0x158] sm:$0xff]
    %v135 = vld [vmem:[#allocation5 + $0x160] sm:$0xff]
    %v136 = vld [vmem:[#allocation5 + $0x168] sm:$0xff]
    %v137 = vld [vmem:[#allocation5 + $0x170] sm:$0xff]
    %v138 = vld [vmem:[#allocation5 + $0x178] sm:$0xff]
    %v139 = vld [vmem:[#allocation5 + $0x180] sm:$0xff]
    %v140 = vld [vmem:[#allocation5 + $0x188] sm:$0xff]
    %v141 = vld [vmem:[#allocation5 + $0x190] sm:$0xff]
    %v142 = vld [vmem:[#allocation5 + $0x198] sm:$0xff]
    %v143 = vld [vmem:[#allocation5 + $0x1a0] sm:$0xff]
    %v144 = vld [vmem:[#allocation5 + $0x1a8] sm:$0xff]
    %v145 = vld [vmem:[#allocation5 + $0x1b0] sm:$0xff]
    %v146 = vld [vmem:[#allocation5 + $0x1b8] sm:$0xff]
    %v147 = vld [vmem:[#allocation5 + $0x1c0] sm:$0xff]
    %v148 = vld [vmem:[#allocation5 + $0x1c8] sm:$0xff]
    %v149 = vld [vmem:[#allocation5 + $0x1d0] sm:$0xff]
    %v150 = vld [vmem:[#allocation5 + $0x1d8] sm:$0xff]
    %v151 = vld [vmem:[#allocation5 + $0x1e0] sm:$0xff]
    %v152 = vld [vmem:[#allocation5 + $0x1e8] sm:$0xff]
    %v153 = vld [vmem:[#allocation5 + $0x1f0] sm:$0xff]
    %v154 = vld [vmem:[#allocation5 + $0x1f8] sm:$0xff]
    %v155 = vld [vmem:[#allocation5 + $0x200] sm:$0xff]
    %v156 = vld [vmem:[#allocation5 + $0x208] sm:$0xff]
    %v157 = vld [vmem:[#allocation5 + $0x210] sm:$0xff]
    %v158 = vld [vmem:[#allocation5 + $0x218] sm:$0xff]
    %v159 = vld [vmem:[#allocation5 + $0x220] sm:$0xff]
    %v160 = vld [vmem:[#allocation5 + $0x228] sm:$0xff]
    %v161 = vld [vmem:[#allocation5 + $0x230] sm:$0xff]
    %v162 = vld [vmem:[#allocation5 + $0x238] sm:$0xff]
    %v163 = vld [vmem:[#allocation5 + $0x240] sm:$0xff]
    %v164 = vld [vmem:[#allocation5 + $0x248] sm:$0xff]
    %v165 = vld [vmem:[#allocation5 + $0x250] sm:$0xff]
    %v166 = vld [vmem:[#allocation5 + $0x258] sm:$0xff]
    %v167 = vld [vmem:[#allocation5 + $0x260] sm:$0xff]
    %v168 = vld [vmem:[#allocation5 + $0x268] sm:$0xff]
    %v169 = vld [vmem:[#allocation5 + $0x270] sm:$0xff]
    %v170 = vld [vmem:[#allocation5 + $0x278] sm:$0xff]
    %v171 = vld [vmem:[#allocation5 + $0x280] sm:$0xff]
    %v172 = vld [vmem:[#allocation5 + $0x288] sm:$0xff]
    %v173 = vld [vmem:[#allocation5 + $0x290] sm:$0xff]
    %v174 = vld [vmem:[#allocation5 + $0x298] sm:$0xff]
    %v175 = vld [vmem:[#allocation5 + $0x2a0] sm:$0xff]
    %v176 = vld [vmem:[#allocation5 + $0x2a8] sm:$0xff]
    %v177 = vld [vmem:[#allocation5 + $0x2b0] sm:$0xff]
    %v178 = vld [vmem:[#allocation5 + $0x2b8] sm:$0xff]
    %v179 = vld [vmem:[#allocation5 + $0x2c0] sm:$0xff]
    %v180 = vld [vmem:[#allocation5 + $0x2c8] sm:$0xff]
    %v181 = vld [vmem:[#allocation5 + $0x2d0] sm:$0xff]
    %v182 = vld [vmem:[#allocation5 + $0x2d8] sm:$0xff]
    %v183 = vld [vmem:[#allocation5 + $0x2e0] sm:$0xff]
    %v184 = vld [vmem:[#allocation5 + $0x2e8] sm:$0xff]
    %v185 = vld [vmem:[#allocation5 + $0x2f0] sm:$0xff]
    %v186 = vld [vmem:[#allocation5 + $0x2f8] sm:$0xff]
    %v187 = vld [vmem:[#allocation5 + $0x300] sm:$0xff]
    %v188 = vld [vmem:[#allocation5 + $0x308] sm:$0xff]
    %v189 = vld [vmem:[#allocation5 + $0x310] sm:$0xff]
    %v190 = vld [vmem:[#allocation5 + $0x318] sm:$0xff]
    %v191 = vld [vmem:[#allocation5 + $0x320] sm:$0xff]
    %v192 = vld [vmem:[#allocation5 + $0x328] sm:$0xff]
    %v193 = vld [vmem:[#allocation5 + $0x330] sm:$0xff]
    %v194 = vld [vmem:[#allocation5 + $0x338] sm:$0xff]
    %v195 = vld [vmem:[#allocation5 + $0x340] sm:$0xff]
    %v196 = vld [vmem:[#allocation5 + $0x348] sm:$0xff]
    %v197 = vld [vmem:[#allocation5 + $0x350] sm:$0xff]
    %v198 = vld [vmem:[#allocation5 + $0x358] sm:$0xff]
    %v199 = vld [vmem:[#allocation5 + $0x360] sm:$0xff]
    %v200 = vld [vmem:[#allocation5 + $0x368] sm:$0xff]
    %v201 = vld [vmem:[#allocation5 + $0x370] sm:$0xff]
    %v202 = vld [vmem:[#allocation5 + $0x378] sm:$0xff]
    %v203 = vld [vmem:[#allocation5 + $0x380] sm:$0xff]
    %v204 = vld [vmem:[#allocation5 + $0x388] sm:$0xff]
    %v205 = vld [vmem:[#allocation5 + $0x390] sm:$0xff]
    %v206 = vld [vmem:[#allocation5 + $0x398] sm:$0xff]
    %v207 = vld [vmem:[#allocation5 + $0x3a0] sm:$0xff]
    %v208 = vld [vmem:[#allocation5 + $0x3a8] sm:$0xff]
    %v209 = vld [vmem:[#allocation5 + $0x3b0] sm:$0xff]
    %v210 = vld [vmem:[#allocation5 + $0x3b8] sm:$0xff]
    %v211 = vld [vmem:[#allocation5 + $0x3c0] sm:$0xff]
    %v212 = vld [vmem:[#allocation5 + $0x3c8] sm:$0xff]
    %v213 = vld [vmem:[#allocation5 + $0x3d0] sm:$0xff]
    %v214 = vld [vmem:[#allocation5 + $0x3d8] sm:$0xff]
    %v215 = vld [vmem:[#allocation5 + $0x3e0] sm:$0xff]
    %v216 = vld [vmem:[#allocation5 + $0x3e8] sm:$0xff]
    %v217 = vld [vmem:[#allocation5 + $0x3f0] sm:$0xff]
    %v218 = vld [vmem:[#allocation5 + $0x3f8] sm:$0xff]
    %v219 = vld [vmem:[#allocation5 + $0x400] sm:$0xff]
    %v220 = vld [vmem:[#allocation5 + $0x408] sm:$0xff]
    %v221 = vld [vmem:[#allocation5 + $0x410] sm:$0xff]
    %v222 = vld [vmem:[#allocation5 + $0x418] sm:$0xff]
    %v223 = vld [vmem:[#allocation5 + $0x420] sm:$0xff]
    %v224 = vld [vmem:[#allocation5 + $0x428] sm:$0xff]
    %v225 = vld [vmem:[#allocation5 + $0x430] sm:$0xff]
    %v226 = vld [vmem:[#allocation5 + $0x438] sm:$0xff]
    %v227 = vld [vmem:[#allocation5 + $0x440] sm:$0xff]
    %v228 = vld [vmem:[#allocation5 + $0x448] sm:$0xff]
    %v229 = vld [vmem:[#allocation5 + $0x450] sm:$0xff]
    %v230 = vld [vmem:[#allocation5 + $0x458] sm:$0xff]
    %v231 = vld [vmem:[#allocation5 + $0x460] sm:$0xff]
    %v232 = vld [vmem:[#allocation5 + $0x468] sm:$0xff]
    %v233 = vld [vmem:[#allocation5 + $0x470] sm:$0xff]
    %v234 = vld [vmem:[#allocation5 + $0x478] sm:$0xff]
    %v235 = vld [vmem:[#allocation5 + $0x480] sm:$0xff]
    %v236 = vld [vmem:[#allocation5 + $0x488] sm:$0xff]
    %v237 = vld [vmem:[#allocation5 + $0x490] sm:$0xff]
    %v238 = vld [vmem:[#allocation5 + $0x498] sm:$0xff]
    %v239 = vld [vmem:[#allocation5 + $0x4a0] sm:$0xff]
    %v240 = vld [vmem:[#allocation5 + $0x4a8] sm:$0xff]
    %v241 = vld [vmem:[#allocation5 + $0x4b0] sm:$0xff]
    %v242 = vld [vmem:[#allocation5 + $0x4b8] sm:$0xff]
    %v243 = vld [vmem:[#allocation5 + $0x4c0] sm:$0xff]
    %v244 = vld [vmem:[#allocation5 + $0x4c8] sm:$0xff]
    %v245 = vld [vmem:[#allocation5 + $0x4d0] sm:$0xff]
    %v246 = vld [vmem:[#allocation5 + $0x4d8] sm:$0xff]
    %v247 = vld [vmem:[#allocation5 + $0x4e0] sm:$0xff]
    %v248 = vld [vmem:[#allocation5 + $0x4e8] sm:$0xff]
    %v249 = vld [vmem:[#allocation5 + $0x4f0] sm:$0xff]
    %v250 = vld [vmem:[#allocation5 + $0x4f8] sm:$0xff]
    %v251 = vld [vmem:[#allocation5 + $0x500] sm:$0xff]
    %v252 = vld [vmem:[#allocation5 + $0x508] sm:$0xff]
    %v253 = vld [vmem:[#allocation5 + $0x510] sm:$0xff]
    %v254 = vld [vmem:[#allocation5 + $0x518] sm:$0xff]
    %v255 = vld [vmem:[#allocation5 + $0x520] sm:$0xff]
    %v256 = vld [vmem:[#allocation5 + $0x528] sm:$0xff]
    %v257 = vld [vmem:[#allocation5 + $0x530] sm:$0xff]
    %v258 = vld [vmem:[#allocation5 + $0x538] sm:$0xff]
    %v259 = vld [vmem:[#allocation5 + $0x540] sm:$0xff]
    %v260 = vld [vmem:[#allocation5 + $0x548] sm:$0xff]
    %v261 = vld [vmem:[#allocation5 + $0x550] sm:$0xff]
    %v262 = vld [vmem:[#allocation5 + $0x558] sm:$0xff]
    %v263 = vld [vmem:[#allocation5 + $0x560] sm:$0xff]
    %v264 = vld [vmem:[#allocation5 + $0x568] sm:$0xff]
    %v265 = vld [vmem:[#allocation5 + $0x570] sm:$0xff]
    %v266 = vld [vmem:[#allocation5 + $0x578] sm:$0xff]
    %v267 = vld [vmem:[#allocation5 + $0x580] sm:$0xff]
    %v268 = vld [vmem:[#allocation5 + $0x588] sm:$0xff]
    %v269 = vld [vmem:[#allocation5 + $0x590] sm:$0xff]
    %v270 = vld [vmem:[#allocation5 + $0x598] sm:$0xff]
    %v271 = vld [vmem:[#allocation5 + $0x5a0] sm:$0xff]
    %v272 = vld [vmem:[#allocation5 + $0x5a8] sm:$0xff]
    %v273 = vld [vmem:[#allocation5 + $0x5b0] sm:$0xff]
    %v274 = vld [vmem:[#allocation5 + $0x5b8] sm:$0xff]
    %v275 = vld [vmem:[#allocation5 + $0x5c0] sm:$0xff]
    %v276 = vld [vmem:[#allocation5 + $0x5c8] sm:$0xff]
    %v277 = vld [vmem:[#allocation5 + $0x5d0] sm:$0xff]
    %v278 = vld [vmem:[#allocation5 + $0x5d8] sm:$0xff]
    %v279 = vld [vmem:[#allocation5 + $0x5e0] sm:$0xff]
    %v280 = vld [vmem:[#allocation5 + $0x5e8] sm:$0xff]
    %v281 = vld [vmem:[#allocation5 + $0x5f0] sm:$0xff]
    %v282 = vld [vmem:[#allocation5 + $0x5f8] sm:$0xff]
    %v283 = vld [vmem:[%s2] sm:$0xf]
    %v285 = vlaneseq
    %v286 = vshrl.u32 %v285, 7
    %v287 = vsub.s32 0, %v286
    %v288 = vrot.slane %v283, %v287
    %v289 = vlaneseq
    %v290 = vshrl.u32 %v289, 7
    %v291 = vsub.s32 1, %v290
    %v292 = vrot.slane %v283, %v291
    %v293 = vlaneseq
    %v294 = vshrl.u32 %v293, 7
    %v295 = vsub.s32 2, %v294
    %v296 = vrot.slane %v283, %v295
    %v297 = vlaneseq
    %v298 = vshrl.u32 %v297, 7
    %v299 = vsub.s32 3, %v298
    %v300 = vrot.slane %v283, %v299
    %v308 = vunpack.c.l.b16 %v88
    %v309 = vunpack.c.h.b16 %v88
    %v310 = vunpack.c.l.b16 %v89
    %v311 = vunpack.c.h.b16 %v89
    %v312 = vunpack.c.l.b16 %v90
    %v313 = vunpack.c.h.b16 %v90
    %v314 = vpack.c.b16 %v308, %v308
    %v315 = vpack.c.b16 %v309, %v309
    %v316 = vpack.c.b16 %v310, %v310
    %v317 = vpack.c.b16 %v311, %v311
    %v318 = vpack.c.b16 %v312, %v312
    %v319 = vpack.c.b16 %v313, %v313
    %v518 = vunpack.c.l.b16 %v91
    %v519 = vunpack.c.h.b16 %v91
    %v520 = vunpack.c.l.b16 %v92
    %v521 = vunpack.c.h.b16 %v92
    %v522 = vunpack.c.l.b16 %v93
    %v523 = vunpack.c.h.b16 %v93
    %v524 = vunpack.c.l.b16 %v94
    %v525 = vunpack.c.h.b16 %v94
    %v526 = vunpack.c.l.b16 %v95
    %v527 = vunpack.c.h.b16 %v95
    %v528 = vunpack.c.l.b16 %v96
    %v529 = vunpack.c.h.b16 %v96
    %v530 = vunpack.c.l.b16 %v97
    %v531 = vunpack.c.h.b16 %v97
    %v532 = vunpack.c.l.b16 %v98
    %v533 = vunpack.c.h.b16 %v98
    %v534 = vunpack.c.l.b16 %v99
    %v535 = vunpack.c.h.b16 %v99
    %v536 = vunpack.c.l.b16 %v100
    %v537 = vunpack.c.h.b16 %v100
    %v538 = vunpack.c.l.b16 %v101
    %v539 = vunpack.c.h.b16 %v101
    %v540 = vunpack.c.l.b16 %v102
    %v541 = vunpack.c.h.b16 %v102
    %v542 = vunpack.c.l.b16 %v103
    %v543 = vunpack.c.h.b16 %v103
    %v544 = vunpack.c.l.b16 %v104
    %v545 = vunpack.c.h.b16 %v104
    %v546 = vunpack.c.l.b16 %v105
    %v547 = vunpack.c.h.b16 %v105
    %v548 = vunpack.c.l.b16 %v106
    %v549 = vunpack.c.h.b16 %v106
    %v550 = vunpack.c.l.b16 %v107
    %v551 = vunpack.c.h.b16 %v107
    %v552 = vunpack.c.l.b16 %v108
    %v553 = vunpack.c.h.b16 %v108
    %v554 = vunpack.c.l.b16 %v109
    %v555 = vunpack.c.h.b16 %v109
    %v556 = vunpack.c.l.b16 %v110
    %v557 = vunpack.c.h.b16 %v110
    %v558 = vunpack.c.l.b16 %v111
    %v559 = vunpack.c.h.b16 %v111
    %v560 = vunpack.c.l.b16 %v112
    %v561 = vunpack.c.h.b16 %v112
    %v562 = vunpack.c.l.b16 %v113
    %v563 = vunpack.c.h.b16 %v113
    %v564 = vunpack.c.l.b16 %v114
    %v565 = vunpack.c.h.b16 %v114
    %v566 = vunpack.c.l.b16 %v115
    %v567 = vunpack.c.h.b16 %v115
    %v568 = vunpack.c.l.b16 %v116
    %v569 = vunpack.c.h.b16 %v116
    %v570 = vunpack.c.l.b16 %v117
    %v571 = vunpack.c.h.b16 %v117
    %v572 = vunpack.c.l.b16 %v118
    %v573 = vunpack.c.h.b16 %v118
    %v574 = vunpack.c.l.b16 %v119
    %v575 = vunpack.c.h.b16 %v119
    %v576 = vunpack.c.l.b16 %v120
    %v577 = vunpack.c.h.b16 %v120
    %v578 = vunpack.c.l.b16 %v121
    %v579 = vunpack.c.h.b16 %v121
    %v580 = vunpack.c.l.b16 %v122
    %v581 = vunpack.c.h.b16 %v122
    %v582 = vunpack.c.l.b16 %v123
    %v583 = vunpack.c.h.b16 %v123
    %v584 = vunpack.c.l.b16 %v124
    %v585 = vunpack.c.h.b16 %v124
    %v586 = vunpack.c.l.b16 %v125
    %v587 = vunpack.c.h.b16 %v125
    %v588 = vunpack.c.l.b16 %v126
    %v589 = vunpack.c.h.b16 %v126
    %v590 = vunpack.c.l.b16 %v127
    %v591 = vunpack.c.h.b16 %v127
    %v592 = vunpack.c.l.b16 %v128
    %v593 = vunpack.c.h.b16 %v128
    %v594 = vunpack.c.l.b16 %v129
    %v595 = vunpack.c.h.b16 %v129
    %v596 = vunpack.c.l.b16 %v130
    %v597 = vunpack.c.h.b16 %v130
    %v598 = vunpack.c.l.b16 %v131
    %v599 = vunpack.c.h.b16 %v131
    %v600 = vunpack.c.l.b16 %v132
    %v601 = vunpack.c.h.b16 %v132
    %v602 = vunpack.c.l.b16 %v133
    %v603 = vunpack.c.h.b16 %v133
    %v604 = vunpack.c.l.b16 %v134
    %v605 = vunpack.c.h.b16 %v134
    %v606 = vunpack.c.l.b16 %v135
    %v607 = vunpack.c.h.b16 %v135
    %v608 = vunpack.c.l.b16 %v136
    %v609 = vunpack.c.h.b16 %v136
    %v610 = vunpack.c.l.b16 %v137
    %v611 = vunpack.c.h.b16 %v137
    %v612 = vunpack.c.l.b16 %v138
    %v613 = vunpack.c.h.b16 %v138
    %v614 = vunpack.c.l.b16 %v139
    %v615 = vunpack.c.h.b16 %v139
    %v616 = vunpack.c.l.b16 %v140
    %v617 = vunpack.c.h.b16 %v140
    %v618 = vunpack.c.l.b16 %v141
    %v619 = vunpack.c.h.b16 %v141
    %v620 = vunpack.c.l.b16 %v142
    %v621 = vunpack.c.h.b16 %v142
    %v622 = vunpack.c.l.b16 %v143
    %v623 = vunpack.c.h.b16 %v143
    %v624 = vunpack.c.l.b16 %v144
    %v625 = vunpack.c.h.b16 %v144
    %v626 = vunpack.c.l.b16 %v145
    %v627 = vunpack.c.h.b16 %v145
    %v628 = vunpack.c.l.b16 %v146
    %v629 = vunpack.c.h.b16 %v146
    %v630 = vunpack.c.l.b16 %v147
    %v631 = vunpack.c.h.b16 %v147
    %v632 = vunpack.c.l.b16 %v148
    %v633 = vunpack.c.h.b16 %v148
    %v634 = vunpack.c.l.b16 %v149
    %v635 = vunpack.c.h.b16 %v149
    %v636 = vunpack.c.l.b16 %v150
    %v637 = vunpack.c.h.b16 %v150
    %v638 = vunpack.c.l.b16 %v151
    %v639 = vunpack.c.h.b16 %v151
    %v640 = vunpack.c.l.b16 %v152
    %v641 = vunpack.c.h.b16 %v152
    %v642 = vunpack.c.l.b16 %v153
    %v643 = vunpack.c.h.b16 %v153
    %v644 = vunpack.c.l.b16 %v154
    %v645 = vunpack.c.h.b16 %v154
    %v646 = vunpack.c.l.b16 %v155
    %v647 = vunpack.c.h.b16 %v155
    %v648 = vunpack.c.l.b16 %v156
    %v649 = vunpack.c.h.b16 %v156
    %v650 = vunpack.c.l.b16 %v157
    %v651 = vunpack.c.h.b16 %v157
    %v652 = vunpack.c.l.b16 %v158
    %v653 = vunpack.c.h.b16 %v158
    %v654 = vunpack.c.l.b16 %v159
    %v655 = vunpack.c.h.b16 %v159
    %v656 = vunpack.c.l.b16 %v160
    %v657 = vunpack.c.h.b16 %v160
    %v658 = vunpack.c.l.b16 %v161
    %v659 = vunpack.c.h.b16 %v161
    %v660 = vunpack.c.l.b16 %v162
    %v661 = vunpack.c.h.b16 %v162
    %v662 = vunpack.c.l.b16 %v163
    %v663 = vunpack.c.h.b16 %v163
    %v664 = vunpack.c.l.b16 %v164
    %v665 = vunpack.c.h.b16 %v164
    %v666 = vunpack.c.l.b16 %v165
    %v667 = vunpack.c.h.b16 %v165
    %v668 = vunpack.c.l.b16 %v166
    %v669 = vunpack.c.h.b16 %v166
    %v670 = vunpack.c.l.b16 %v167
    %v671 = vunpack.c.h.b16 %v167
    %v672 = vunpack.c.l.b16 %v168
    %v673 = vunpack.c.h.b16 %v168
    %v674 = vunpack.c.l.b16 %v169
    %v675 = vunpack.c.h.b16 %v169
    %v676 = vunpack.c.l.b16 %v170
    %v677 = vunpack.c.h.b16 %v170
    %v678 = vunpack.c.l.b16 %v171
    %v679 = vunpack.c.h.b16 %v171
    %v680 = vunpack.c.l.b16 %v172
    %v681 = vunpack.c.h.b16 %v172
    %v682 = vunpack.c.l.b16 %v173
    %v683 = vunpack.c.h.b16 %v173
    %v684 = vunpack.c.l.b16 %v174
    %v685 = vunpack.c.h.b16 %v174
    %v686 = vunpack.c.l.b16 %v175
    %v687 = vunpack.c.h.b16 %v175
    %v688 = vunpack.c.l.b16 %v176
    %v689 = vunpack.c.h.b16 %v176
    %v690 = vunpack.c.l.b16 %v177
    %v691 = vunpack.c.h.b16 %v177
    %v692 = vunpack.c.l.b16 %v178
    %v693 = vunpack.c.h.b16 %v178
    %v694 = vunpack.c.l.b16 %v179
    %v695 = vunpack.c.h.b16 %v179
    %v696 = vunpack.c.l.b16 %v180
    %v697 = vunpack.c.h.b16 %v180
    %v698 = vunpack.c.l.b16 %v181
    %v699 = vunpack.c.h.b16 %v181
    %v700 = vunpack.c.l.b16 %v182
    %v701 = vunpack.c.h.b16 %v182
    %v702 = vunpack.c.l.b16 %v183
    %v703 = vunpack.c.h.b16 %v183
    %v704 = vunpack.c.l.b16 %v184
    %v705 = vunpack.c.h.b16 %v184
    %v706 = vunpack.c.l.b16 %v185
    %v707 = vunpack.c.h.b16 %v185
    %v708 = vunpack.c.l.b16 %v186
    %v709 = vunpack.c.h.b16 %v186
    %v710 = vunpack.c.l.b16 %v187
    %v711 = vunpack.c.h.b16 %v187
    %v712 = vunpack.c.l.b16 %v188
    %v713 = vunpack.c.h.b16 %v188
    %v714 = vunpack.c.l.b16 %v189
    %v715 = vunpack.c.h.b16 %v189
    %v716 = vunpack.c.l.b16 %v190
    %v717 = vunpack.c.h.b16 %v190
    %v718 = vunpack.c.l.b16 %v191
    %v719 = vunpack.c.h.b16 %v191
    %v720 = vunpack.c.l.b16 %v192
    %v721 = vunpack.c.h.b16 %v192
    %v722 = vunpack.c.l.b16 %v193
    %v723 = vunpack.c.h.b16 %v193
    %v724 = vunpack.c.l.b16 %v194
    %v725 = vunpack.c.h.b16 %v194
    %v726 = vunpack.c.l.b16 %v195
    %v727 = vunpack.c.h.b16 %v195
    %v728 = vunpack.c.l.b16 %v196
    %v729 = vunpack.c.h.b16 %v196
    %v730 = vunpack.c.l.b16 %v197
    %v731 = vunpack.c.h.b16 %v197
    %v732 = vunpack.c.l.b16 %v198
    %v733 = vunpack.c.h.b16 %v198
    %v734 = vunpack.c.l.b16 %v199
    %v735 = vunpack.c.h.b16 %v199
    %v736 = vunpack.c.l.b16 %v200
    %v737 = vunpack.c.h.b16 %v200
    %v738 = vunpack.c.l.b16 %v201
    %v739 = vunpack.c.h.b16 %v201
    %v740 = vunpack.c.l.b16 %v202
    %v741 = vunpack.c.h.b16 %v202
    %v742 = vunpack.c.l.b16 %v203
    %v743 = vunpack.c.h.b16 %v203
    %v744 = vunpack.c.l.b16 %v204
    %v745 = vunpack.c.h.b16 %v204
    %v746 = vunpack.c.l.b16 %v205
    %v747 = vunpack.c.h.b16 %v205
    %v748 = vunpack.c.l.b16 %v206
    %v749 = vunpack.c.h.b16 %v206
    %v750 = vunpack.c.l.b16 %v207
    %v751 = vunpack.c.h.b16 %v207
    %v752 = vunpack.c.l.b16 %v208
    %v753 = vunpack.c.h.b16 %v208
    %v754 = vunpack.c.l.b16 %v209
    %v755 = vunpack.c.h.b16 %v209
    %v756 = vunpack.c.l.b16 %v210
    %v757 = vunpack.c.h.b16 %v210
    %v758 = vunpack.c.l.b16 %v211
    %v759 = vunpack.c.h.b16 %v211
    %v760 = vunpack.c.l.b16 %v212
    %v761 = vunpack.c.h.b16 %v212
    %v762 = vunpack.c.l.b16 %v213
    %v763 = vunpack.c.h.b16 %v213
    %v764 = vunpack.c.l.b16 %v214
    %v765 = vunpack.c.h.b16 %v214
    %v766 = vunpack.c.l.b16 %v215
    %v767 = vunpack.c.h.b16 %v215
    %v768 = vunpack.c.l.b16 %v216
    %v769 = vunpack.c.h.b16 %v216
    %v770 = vunpack.c.l.b16 %v217
    %v771 = vunpack.c.h.b16 %v217
    %v772 = vunpack.c.l.b16 %v218
    %v773 = vunpack.c.h.b16 %v218
    %v774 = vunpack.c.l.b16 %v219
    %v775 = vunpack.c.h.b16 %v219
    %v776 = vunpack.c.l.b16 %v220
    %v777 = vunpack.c.h.b16 %v220
    %v778 = vunpack.c.l.b16 %v221
    %v779 = vunpack.c.h.b16 %v221
    %v780 = vunpack.c.l.b16 %v222
    %v781 = vunpack.c.h.b16 %v222
    %v782 = vunpack.c.l.b16 %v223
    %v783 = vunpack.c.h.b16 %v223
    %v784 = vunpack.c.l.b16 %v224
    %v785 = vunpack.c.h.b16 %v224
    %v786 = vunpack.c.l.b16 %v225
    %v787 = vunpack.c.h.b16 %v225
    %v788 = vunpack.c.l.b16 %v226
    %v789 = vunpack.c.h.b16 %v226
    %v790 = vunpack.c.l.b16 %v227
    %v791 = vunpack.c.h.b16 %v227
    %v792 = vunpack.c.l.b16 %v228
    %v793 = vunpack.c.h.b16 %v228
    %v794 = vunpack.c.l.b16 %v229
    %v795 = vunpack.c.h.b16 %v229
    %v796 = vunpack.c.l.b16 %v230
    %v797 = vunpack.c.h.b16 %v230
    %v798 = vunpack.c.l.b16 %v231
    %v799 = vunpack.c.h.b16 %v231
    %v800 = vunpack.c.l.b16 %v232
    %v801 = vunpack.c.h.b16 %v232
    %v802 = vunpack.c.l.b16 %v233
    %v803 = vunpack.c.h.b16 %v233
    %v804 = vunpack.c.l.b16 %v234
    %v805 = vunpack.c.h.b16 %v234
    %v806 = vunpack.c.l.b16 %v235
    %v807 = vunpack.c.h.b16 %v235
    %v808 = vunpack.c.l.b16 %v236
    %v809 = vunpack.c.h.b16 %v236
    %v810 = vunpack.c.l.b16 %v237
    %v811 = vunpack.c.h.b16 %v237
    %v812 = vunpack.c.l.b16 %v238
    %v813 = vunpack.c.h.b16 %v238
    %v814 = vunpack.c.l.b16 %v239
    %v815 = vunpack.c.h.b16 %v239
    %v816 = vunpack.c.l.b16 %v240
    %v817 = vunpack.c.h.b16 %v240
    %v818 = vunpack.c.l.b16 %v241
    %v819 = vunpack.c.h.b16 %v241
    %v820 = vunpack.c.l.b16 %v242
    %v821 = vunpack.c.h.b16 %v242
    %v822 = vunpack.c.l.b16 %v243
    %v823 = vunpack.c.h.b16 %v243
    %v824 = vunpack.c.l.b16 %v244
    %v825 = vunpack.c.h.b16 %v244
    %v826 = vunpack.c.l.b16 %v245
    %v827 = vunpack.c.h.b16 %v245
    %v828 = vunpack.c.l.b16 %v246
    %v829 = vunpack.c.h.b16 %v246
    %v830 = vunpack.c.l.b16 %v247
    %v831 = vunpack.c.h.b16 %v247
    %v832 = vunpack.c.l.b16 %v248
    %v833 = vunpack.c.h.b16 %v248
    %v834 = vunpack.c.l.b16 %v249
    %v835 = vunpack.c.h.b16 %v249
    %v836 = vunpack.c.l.b16 %v250
    %v837 = vunpack.c.h.b16 %v250
    %v838 = vunpack.c.l.b16 %v251
    %v839 = vunpack.c.h.b16 %v251
    %v840 = vunpack.c.l.b16 %v252
    %v841 = vunpack.c.h.b16 %v252
    %v842 = vunpack.c.l.b16 %v253
    %v843 = vunpack.c.h.b16 %v253
    %v844 = vunpack.c.l.b16 %v254
    %v845 = vunpack.c.h.b16 %v254
    %v846 = vunpack.c.l.b16 %v255
    %v847 = vunpack.c.h.b16 %v255
    %v848 = vunpack.c.l.b16 %v256
    %v849 = vunpack.c.h.b16 %v256
    %v850 = vunpack.c.l.b16 %v257
    %v851 = vunpack.c.h.b16 %v257
    %v852 = vunpack.c.l.b16 %v258
    %v853 = vunpack.c.h.b16 %v258
    %v854 = vunpack.c.l.b16 %v259
    %v855 = vunpack.c.h.b16 %v259
    %v856 = vunpack.c.l.b16 %v260
    %v857 = vunpack.c.h.b16 %v260
    %v858 = vunpack.c.l.b16 %v261
    %v859 = vunpack.c.h.b16 %v261
    %v860 = vunpack.c.l.b16 %v262
    %v861 = vunpack.c.h.b16 %v262
    %v862 = vunpack.c.l.b16 %v263
    %v863 = vunpack.c.h.b16 %v263
    %v864 = vunpack.c.l.b16 %v264
    %v865 = vunpack.c.h.b16 %v264
    %v866 = vunpack.c.l.b16 %v265
    %v867 = vunpack.c.h.b16 %v265
    %v868 = vunpack.c.l.b16 %v266
    %v869 = vunpack.c.h.b16 %v266
    %v870 = vunpack.c.l.b16 %v267
    %v871 = vunpack.c.h.b16 %v267
    %v872 = vunpack.c.l.b16 %v268
    %v873 = vunpack.c.h.b16 %v268
    %v874 = vunpack.c.l.b16 %v269
    %v875 = vunpack.c.h.b16 %v269
    %v876 = vunpack.c.l.b16 %v270
    %v877 = vunpack.c.h.b16 %v270
    %v878 = vunpack.c.l.b16 %v271
    %v879 = vunpack.c.h.b16 %v271
    %v880 = vunpack.c.l.b16 %v272
    %v881 = vunpack.c.h.b16 %v272
    %v882 = vunpack.c.l.b16 %v273
    %v883 = vunpack.c.h.b16 %v273
    %v884 = vunpack.c.l.b16 %v274
    %v885 = vunpack.c.h.b16 %v274
    %v886 = vunpack.c.l.b16 %v275
    %v887 = vunpack.c.h.b16 %v275
    %v888 = vunpack.c.l.b16 %v276
    %v889 = vunpack.c.h.b16 %v276
    %v890 = vunpack.c.l.b16 %v277
    %v891 = vunpack.c.h.b16 %v277
    %v892 = vunpack.c.l.b16 %v278
    %v893 = vunpack.c.h.b16 %v278
    %v894 = vunpack.c.l.b16 %v279
    %v895 = vunpack.c.h.b16 %v279
    %v896 = vunpack.c.l.b16 %v280
    %v897 = vunpack.c.h.b16 %v280
    %v898 = vunpack.c.l.b16 %v281
    %v899 = vunpack.c.h.b16 %v281
    %v900 = vunpack.c.l.b16 %v282
    %v901 = vunpack.c.h.b16 %v282
    %v902 = vpack.c.b16 %v522, %v518
    %v903 = vpack.c.b16 %v523, %v519
    %v904 = vpack.c.b16 %v524, %v520
    %v905 = vpack.c.b16 %v525, %v521
    %v906 = vpack.c.b16 %v530, %v526
    %v907 = vpack.c.b16 %v531, %v527
    %v908 = vpack.c.b16 %v532, %v528
    %v909 = vpack.c.b16 %v533, %v529
    %v910 = vpack.c.b16 %v538, %v534
    %v911 = vpack.c.b16 %v539, %v535
    %v912 = vpack.c.b16 %v540, %v536
    %v913 = vpack.c.b16 %v541, %v537
    %v914 = vpack.c.b16 %v546, %v542
    %v915 = vpack.c.b16 %v547, %v543
    %v916 = vpack.c.b16 %v548, %v544
    %v917 = vpack.c.b16 %v549, %v545
    %v918 = vpack.c.b16 %v554, %v550
    %v919 = vpack.c.b16 %v555, %v551
    %v920 = vpack.c.b16 %v556, %v552
    %v921 = vpack.c.b16 %v557, %v553
    %v922 = vpack.c.b16 %v562, %v558
    %v923 = vpack.c.b16 %v563, %v559
    %v924 = vpack.c.b16 %v564, %v560
    %v925 = vpack.c.b16 %v565, %v561
    %v926 = vpack.c.b16 %v570, %v566
    %v927 = vpack.c.b16 %v571, %v567
    %v928 = vpack.c.b16 %v572, %v568
    %v929 = vpack.c.b16 %v573, %v569
    %v930 = vpack.c.b16 %v578, %v574
    %v931 = vpack.c.b16 %v579, %v575
    %v932 = vpack.c.b16 %v580, %v576
    %v933 = vpack.c.b16 %v581, %v577
    %v934 = vpack.c.b16 %v586, %v582
    %v935 = vpack.c.b16 %v587, %v583
    %v936 = vpack.c.b16 %v588, %v584
    %v937 = vpack.c.b16 %v589, %v585
    %v938 = vpack.c.b16 %v594, %v590
    %v939 = vpack.c.b16 %v595, %v591
    %v940 = vpack.c.b16 %v596, %v592
    %v941 = vpack.c.b16 %v597, %v593
    %v942 = vpack.c.b16 %v602, %v598
    %v943 = vpack.c.b16 %v603, %v599
    %v944 = vpack.c.b16 %v604, %v600
    %v945 = vpack.c.b16 %v605, %v601
    %v946 = vpack.c.b16 %v610, %v606
    %v947 = vpack.c.b16 %v611, %v607
    %v948 = vpack.c.b16 %v612, %v608
    %v949 = vpack.c.b16 %v613, %v609
    %v950 = vpack.c.b16 %v618, %v614
    %v951 = vpack.c.b16 %v619, %v615
    %v952 = vpack.c.b16 %v620, %v616
    %v953 = vpack.c.b16 %v621, %v617
    %v954 = vpack.c.b16 %v626, %v622
    %v955 = vpack.c.b16 %v627, %v623
    %v956 = vpack.c.b16 %v628, %v624
    %v957 = vpack.c.b16 %v629, %v625
    %v958 = vpack.c.b16 %v634, %v630
    %v959 = vpack.c.b16 %v635, %v631
    %v960 = vpack.c.b16 %v636, %v632
    %v961 = vpack.c.b16 %v637, %v633
    %v962 = vpack.c.b16 %v642, %v638
    %v963 = vpack.c.b16 %v643, %v639
    %v964 = vpack.c.b16 %v644, %v640
    %v965 = vpack.c.b16 %v645, %v641
    %v966 = vpack.c.b16 %v650, %v646
    %v967 = vpack.c.b16 %v651, %v647
    %v968 = vpack.c.b16 %v652, %v648
    %v969 = vpack.c.b16 %v653, %v649
    %v970 = vpack.c.b16 %v658, %v654
    %v971 = vpack.c.b16 %v659, %v655
    %v972 = vpack.c.b16 %v660, %v656
    %v973 = vpack.c.b16 %v661, %v657
    %v974 = vpack.c.b16 %v666, %v662
    %v975 = vpack.c.b16 %v667, %v663
    %v976 = vpack.c.b16 %v668, %v664
    %v977 = vpack.c.b16 %v669, %v665
    %v978 = vpack.c.b16 %v674, %v670
    %v979 = vpack.c.b16 %v675, %v671
    %v980 = vpack.c.b16 %v676, %v672
    %v981 = vpack.c.b16 %v677, %v673
    %v982 = vpack.c.b16 %v682, %v678
    %v983 = vpack.c.b16 %v683, %v679
    %v984 = vpack.c.b16 %v684, %v680
    %v985 = vpack.c.b16 %v685, %v681
    %v986 = vpack.c.b16 %v690, %v686
    %v987 = vpack.c.b16 %v691, %v687
    %v988 = vpack.c.b16 %v692, %v688
    %v989 = vpack.c.b16 %v693, %v689
    %v990 = vpack.c.b16 %v698, %v694
    %v991 = vpack.c.b16 %v699, %v695
    %v992 = vpack.c.b16 %v700, %v696
    %v993 = vpack.c.b16 %v701, %v697
    %v994 = vpack.c.b16 %v706, %v702
    %v995 = vpack.c.b16 %v707, %v703
    %v996 = vpack.c.b16 %v708, %v704
    %v997 = vpack.c.b16 %v709, %v705
    %v998 = vpack.c.b16 %v714, %v710
    %v999 = vpack.c.b16 %v715, %v711
    %v1000 = vpack.c.b16 %v716, %v712
    %v1001 = vpack.c.b16 %v717, %v713
    %v1002 = vpack.c.b16 %v722, %v718
    %v1003 = vpack.c.b16 %v723, %v719
    %v1004 = vpack.c.b16 %v724, %v720
    %v1005 = vpack.c.b16 %v725, %v721
    %v1006 = vpack.c.b16 %v730, %v726
    %v1007 = vpack.c.b16 %v731, %v727
    %v1008 = vpack.c.b16 %v732, %v728
    %v1009 = vpack.c.b16 %v733, %v729
    %v1010 = vpack.c.b16 %v738, %v734
    %v1011 = vpack.c.b16 %v739, %v735
    %v1012 = vpack.c.b16 %v740, %v736
    %v1013 = vpack.c.b16 %v741, %v737
    %v1014 = vpack.c.b16 %v746, %v742
    %v1015 = vpack.c.b16 %v747, %v743
    %v1016 = vpack.c.b16 %v748, %v744
    %v1017 = vpack.c.b16 %v749, %v745
    %v1018 = vpack.c.b16 %v754, %v750
    %v1019 = vpack.c.b16 %v755, %v751
    %v1020 = vpack.c.b16 %v756, %v752
    %v1021 = vpack.c.b16 %v757, %v753
    %v1022 = vpack.c.b16 %v762, %v758
    %v1023 = vpack.c.b16 %v763, %v759
    %v1024 = vpack.c.b16 %v764, %v760
    %v1025 = vpack.c.b16 %v765, %v761
    %v1026 = vpack.c.b16 %v770, %v766
    %v1027 = vpack.c.b16 %v771, %v767
    %v1028 = vpack.c.b16 %v772, %v768
    %v1029 = vpack.c.b16 %v773, %v769
    %v1030 = vpack.c.b16 %v778, %v774
    %v1031 = vpack.c.b16 %v779, %v775
    %v1032 = vpack.c.b16 %v780, %v776
    %v1033 = vpack.c.b16 %v781, %v777
    %v1034 = vpack.c.b16 %v786, %v782
    %v1035 = vpack.c.b16 %v787, %v783
    %v1036 = vpack.c.b16 %v788, %v784
    %v1037 = vpack.c.b16 %v789, %v785
    %v1038 = vpack.c.b16 %v794, %v790
    %v1039 = vpack.c.b16 %v795, %v791
    %v1040 = vpack.c.b16 %v796, %v792
    %v1041 = vpack.c.b16 %v797, %v793
    %v1042 = vpack.c.b16 %v802, %v798
    %v1043 = vpack.c.b16 %v803, %v799
    %v1044 = vpack.c.b16 %v804, %v800
    %v1045 = vpack.c.b16 %v805, %v801
    %v1046 = vpack.c.b16 %v810, %v806
    %v1047 = vpack.c.b16 %v811, %v807
    %v1048 = vpack.c.b16 %v812, %v808
    %v1049 = vpack.c.b16 %v813, %v809
    %v1050 = vpack.c.b16 %v818, %v814
    %v1051 = vpack.c.b16 %v819, %v815
    %v1052 = vpack.c.b16 %v820, %v816
    %v1053 = vpack.c.b16 %v821, %v817
    %v1054 = vpack.c.b16 %v826, %v822
    %v1055 = vpack.c.b16 %v827, %v823
    %v1056 = vpack.c.b16 %v828, %v824
    %v1057 = vpack.c.b16 %v829, %v825
    %v1058 = vpack.c.b16 %v834, %v830
    %v1059 = vpack.c.b16 %v835, %v831
    %v1060 = vpack.c.b16 %v836, %v832
    %v1061 = vpack.c.b16 %v837, %v833
    %v1062 = vpack.c.b16 %v842, %v838
    %v1063 = vpack.c.b16 %v843, %v839
    %v1064 = vpack.c.b16 %v844, %v840
    %v1065 = vpack.c.b16 %v845, %v841
    %v1066 = vpack.c.b16 %v850, %v846
    %v1067 = vpack.c.b16 %v851, %v847
    %v1068 = vpack.c.b16 %v852, %v848
    %v1069 = vpack.c.b16 %v853, %v849
    %v1070 = vpack.c.b16 %v858, %v854
    %v1071 = vpack.c.b16 %v859, %v855
    %v1072 = vpack.c.b16 %v860, %v856
    %v1073 = vpack.c.b16 %v861, %v857
    %v1074 = vpack.c.b16 %v866, %v862
    %v1075 = vpack.c.b16 %v867, %v863
    %v1076 = vpack.c.b16 %v868, %v864
    %v1077 = vpack.c.b16 %v869, %v865
    %v1078 = vpack.c.b16 %v874, %v870
    %v1079 = vpack.c.b16 %v875, %v871
    %v1080 = vpack.c.b16 %v876, %v872
    %v1081 = vpack.c.b16 %v877, %v873
    %v1082 = vpack.c.b16 %v882, %v878
    %v1083 = vpack.c.b16 %v883, %v879
    %v1084 = vpack.c.b16 %v884, %v880
    %v1085 = vpack.c.b16 %v885, %v881
    %v1086 = vpack.c.b16 %v890, %v886
    %v1087 = vpack.c.b16 %v891, %v887
    %v1088 = vpack.c.b16 %v892, %v888
    %v1089 = vpack.c.b16 %v893, %v889
    %v1090 = vpack.c.b16 %v898, %v894
    %v1091 = vpack.c.b16 %v899, %v895
    %v1092 = vpack.c.b16 %v900, %v896
    %v1093 = vpack.c.b16 %v901, %v897
    %1286 = vmatprep.subr.bf16.mxu0 %v931
    %1287 = vmatpush1.bf16.msra.mxu0 %v930
    %1288 = vmatprep.subr.bf16.mxu0 %v927
    %1289 = vmatpush1.bf16.msra.mxu0 %v926
    %1290 = vmatprep.subr.bf16.mxu0 %v923
    %1291 = vmatpush1.bf16.msra.mxu0 %v922
    %1292 = vmatprep.subr.bf16.mxu0 %v919
    %1293 = vmatpush1.bf16.msra.mxu0 %v918
    %1294 = vmatprep.subr.bf16.mxu0 %v915
    %1295 = vmatpush1.bf16.msra.mxu0 %v914
    %1296 = vmatprep.subr.bf16.mxu0 %v911
    %1297 = vmatpush1.bf16.msra.mxu0 %v910
    %1298 = vmatprep.subr.bf16.mxu0 %v907
    %1299 = vmatpush1.bf16.msra.mxu0 %v906
    %1300 = vmatprep.subr.bf16.mxu0 %v903
    %1301 = vmatpush1.bf16.msra.mxu0 %v902
    %1302 = vmatprep.subr.bf16.mxu0 %v963
    %1303 = vmatpush2.bf16.msra.mxu0 %v962
    %1304 = vmatprep.subr.bf16.mxu0 %v959
    %1305 = vmatpush2.bf16.msra.mxu0 %v958
    %1306 = vmatprep.subr.bf16.mxu0 %v955
    %1307 = vmatpush2.bf16.msra.mxu0 %v954
    %1308 = vmatprep.subr.bf16.mxu0 %v951
    %1309 = vmatpush2.bf16.msra.mxu0 %v950
    %1310 = vmatprep.subr.bf16.mxu0 %v947
    %1311 = vmatpush2.bf16.msra.mxu0 %v946
    %1312 = vmatprep.subr.bf16.mxu0 %v943
    %1313 = vmatpush2.bf16.msra.mxu0 %v942
    %1314 = vmatprep.subr.bf16.mxu0 %v939
    %1315 = vmatpush2.bf16.msra.mxu0 %v938
    %1316 = vmatprep.subr.bf16.mxu0 %v935
    %1317 = vmatpush2.bf16.msra.mxu0 %v934
    %1318 = vmatprep.mubr.bf16.mxu0 %v315
    %1319 = vmatmul.mubr.bf16.gmra.mxu0 %v314
    %v1320 = vpop.f32.mrf.mxu0
    %v1321 = vadd.f32 %v288, %v1320
    %v1322 = vpop.f32.mrf.mxu0
    %v1323 = vadd.f32 %v292, %v1322
    %v1324 = vpop.f32.mrf.mxu0
    %v1325 = vpop.f32.mrf.mxu0
    %1326 = vdwg.mxu0
    %1327 = vmatprep.subr.bf16.mxu0 %v995
    %1328 = vmatpush1.bf16.msra.mxu0 %v994
    %1329 = vmatprep.subr.bf16.mxu0 %v991
    %1330 = vmatpush1.bf16.msra.mxu0 %v990
    %1331 = vmatprep.subr.bf16.mxu0 %v987
    %1332 = vmatpush1.bf16.msra.mxu0 %v986
    %1333 = vmatprep.subr.bf16.mxu0 %v983
    %1334 = vmatpush1.bf16.msra.mxu0 %v982
    %1335 = vmatprep.subr.bf16.mxu0 %v979
    %1336 = vmatpush1.bf16.msra.mxu0 %v978
    %1337 = vmatprep.subr.bf16.mxu0 %v975
    %1338 = vmatpush1.bf16.msra.mxu0 %v974
    %1339 = vmatprep.subr.bf16.mxu0 %v971
    %1340 = vmatpush1.bf16.msra.mxu0 %v970
    %1341 = vmatprep.subr.bf16.mxu0 %v967
    %1342 = vmatpush1.bf16.msra.mxu0 %v966
    %1343 = vmatprep.subr.bf16.mxu0 %v1027
    %1344 = vmatpush2.bf16.msra.mxu0 %v1026
    %1345 = vmatprep.subr.bf16.mxu0 %v1023
    %1346 = vmatpush2.bf16.msra.mxu0 %v1022
    %1347 = vmatprep.subr.bf16.mxu0 %v1019
    %1348 = vmatpush2.bf16.msra.mxu0 %v1018
    %1349 = vmatprep.subr.bf16.mxu0 %v1015
    %1350 = vmatpush2.bf16.msra.mxu0 %v1014
    %1351 = vmatprep.subr.bf16.mxu0 %v1011
    %1352 = vmatpush2.bf16.msra.mxu0 %v1010
    %1353 = vmatprep.subr.bf16.mxu0 %v1007
    %1354 = vmatpush2.bf16.msra.mxu0 %v1006
    %1355 = vmatprep.subr.bf16.mxu0 %v1003
    %1356 = vmatpush2.bf16.msra.mxu0 %v1002
    %1357 = vmatprep.subr.bf16.mxu0 %v999
    %1358 = vmatpush2.bf16.msra.mxu0 %v998
    %1359 = vmatprep.mubr.bf16.mxu0 %v317
    %1360 = vmatmul.mubr.bf16.gmra.mxu0 %v316
    %v1361 = vpop.f32.mrf.mxu0
    %v1362 = vadd.f32 %v1321, %v1361
    %v1363 = vpop.f32.mrf.mxu0
    %v1364 = vadd.f32 %v1323, %v1363
    %v1365 = vpop.f32.mrf.mxu0
    %v1366 = vpop.f32.mrf.mxu0
    %1367 = vdwg.mxu0
    %1368 = vmatprep.subr.bf16.mxu0 %v1059
    %1369 = vmatpush1.bf16.msra.mxu0 %v1058
    %1370 = vmatprep.subr.bf16.mxu0 %v1055
    %1371 = vmatpush1.bf16.msra.mxu0 %v1054
    %1372 = vmatprep.subr.bf16.mxu0 %v1051
    %1373 = vmatpush1.bf16.msra.mxu0 %v1050
    %1374 = vmatprep.subr.bf16.mxu0 %v1047
    %1375 = vmatpush1.bf16.msra.mxu0 %v1046
    %1376 = vmatprep.subr.bf16.mxu0 %v1043
    %1377 = vmatpush1.bf16.msra.mxu0 %v1042
    %1378 = vmatprep.subr.bf16.mxu0 %v1039
    %1379 = vmatpush1.bf16.msra.mxu0 %v1038
    %1380 = vmatprep.subr.bf16.mxu0 %v1035
    %1381 = vmatpush1.bf16.msra.mxu0 %v1034
    %1382 = vmatprep.subr.bf16.mxu0 %v1031
    %1383 = vmatpush1.bf16.msra.mxu0 %v1030
    %1384 = vmatprep.subr.bf16.mxu0 %v1091
    %1385 = vmatpush2.bf16.msra.mxu0 %v1090
    %1386 = vmatprep.subr.bf16.mxu0 %v1087
    %1387 = vmatpush2.bf16.msra.mxu0 %v1086
    %1388 = vmatprep.subr.bf16.mxu0 %v1083
    %1389 = vmatpush2.bf16.msra.mxu0 %v1082
    %1390 = vmatprep.subr.bf16.mxu0 %v1079
    %1391 = vmatpush2.bf16.msra.mxu0 %v1078
    %1392 = vmatprep.subr.bf16.mxu0 %v1075
    %1393 = vmatpush2.bf16.msra.mxu0 %v1074
    %1394 = vmatprep.subr.bf16.mxu0 %v1071
    %1395 = vmatpush2.bf16.msra.mxu0 %v1070
    %1396 = vmatprep.subr.bf16.mxu0 %v1067
    %1397 = vmatpush2.bf16.msra.mxu0 %v1066
    %1398 = vmatprep.subr.bf16.mxu0 %v1063
    %1399 = vmatpush2.bf16.msra.mxu0 %v1062
    %1400 = vmatprep.mubr.bf16.mxu0 %v319
    %1401 = vmatmul.mubr.bf16.gmra.mxu0 %v318
    %v1402 = vpop.f32.mrf.mxu0
    %v1403 = vadd.f32 %v1362, %v1402
    %v1404 = vpop.f32.mrf.mxu0
    %v1405 = vadd.f32 %v1364, %v1404
    %v1406 = vpop.f32.mrf.mxu0
    %v1407 = vpop.f32.mrf.mxu0
    %1408 = vdwg.mxu0
    %1409 = vmatprep.subr.bf16.mxu0 %v933
    %1410 = vmatpush1.bf16.msra.mxu0 %v932
    %1411 = vmatprep.subr.bf16.mxu0 %v929
    %1412 = vmatpush1.bf16.msra.mxu0 %v928
    %1413 = vmatprep.subr.bf16.mxu0 %v925
    %1414 = vmatpush1.bf16.msra.mxu0 %v924
    %1415 = vmatprep.subr.bf16.mxu0 %v921
    %1416 = vmatpush1.bf16.msra.mxu0 %v920
    %1417 = vmatprep.subr.bf16.mxu0 %v917
    %1418 = vmatpush1.bf16.msra.mxu0 %v916
    %1419 = vmatprep.subr.bf16.mxu0 %v913
    %1420 = vmatpush1.bf16.msra.mxu0 %v912
    %1421 = vmatprep.subr.bf16.mxu0 %v909
    %1422 = vmatpush1.bf16.msra.mxu0 %v908
    %1423 = vmatprep.subr.bf16.mxu0 %v905
    %1424 = vmatpush1.bf16.msra.mxu0 %v904
    %1425 = vmatprep.subr.bf16.mxu0 %v965
    %1426 = vmatpush2.bf16.msra.mxu0 %v964
    %1427 = vmatprep.subr.bf16.mxu0 %v961
    %1428 = vmatpush2.bf16.msra.mxu0 %v960
    %1429 = vmatprep.subr.bf16.mxu0 %v957
    %1430 = vmatpush2.bf16.msra.mxu0 %v956
    %1431 = vmatprep.subr.bf16.mxu0 %v953
    %1432 = vmatpush2.bf16.msra.mxu0 %v952
    %1433 = vmatprep.subr.bf16.mxu0 %v949
    %1434 = vmatpush2.bf16.msra.mxu0 %v948
    %1435 = vmatprep.subr.bf16.mxu0 %v945
    %1436 = vmatpush2.bf16.msra.mxu0 %v944
    %1437 = vmatprep.subr.bf16.mxu0 %v941
    %1438 = vmatpush2.bf16.msra.mxu0 %v940
    %1439 = vmatprep.subr.bf16.mxu0 %v937
    %1440 = vmatpush2.bf16.msra.mxu0 %v936
    %1441 = vmatprep.mubr.bf16.mxu0 %v315
    %1442 = vmatmul.mubr.bf16.gmra.mxu0 %v314
    %v1443 = vpop.f32.mrf.mxu0
    %v1444 = vadd.f32 %v296, %v1443
    %v1445 = vpop.f32.mrf.mxu0
    %v1446 = vadd.f32 %v300, %v1445
    %v1447 = vpop.f32.mrf.mxu0
    %v1448 = vpop.f32.mrf.mxu0
    %1449 = vdwg.mxu0
    %1450 = vmatprep.subr.bf16.mxu0 %v997
    %1451 = vmatpush1.bf16.msra.mxu0 %v996
    %1452 = vmatprep.subr.bf16.mxu0 %v993
    %1453 = vmatpush1.bf16.msra.mxu0 %v992
    %1454 = vmatprep.subr.bf16.mxu0 %v989
    %1455 = vmatpush1.bf16.msra.mxu0 %v988
    %1456 = vmatprep.subr.bf16.mxu0 %v985
    %1457 = vmatpush1.bf16.msra.mxu0 %v984
    %1458 = vmatprep.subr.bf16.mxu0 %v981
    %1459 = vmatpush1.bf16.msra.mxu0 %v980
    %1460 = vmatprep.subr.bf16.mxu0 %v977
    %1461 = vmatpush1.bf16.msra.mxu0 %v976
    %1462 = vmatprep.subr.bf16.mxu0 %v973
    %1463 = vmatpush1.bf16.msra.mxu0 %v972
    %1464 = vmatprep.subr.bf16.mxu0 %v969
    %1465 = vmatpush1.bf16.msra.mxu0 %v968
    %1466 = vmatprep.subr.bf16.mxu0 %v1029
    %1467 = vmatpush2.bf16.msra.mxu0 %v1028
    %1468 = vmatprep.subr.bf16.mxu0 %v1025
    %1469 = vmatpush2.bf16.msra.mxu0 %v1024
    %1470 = vmatprep.subr.bf16.mxu0 %v1021
    %1471 = vmatpush2.bf16.msra.mxu0 %v1020
    %1472 = vmatprep.subr.bf16.mxu0 %v1017
    %1473 = vmatpush2.bf16.msra.mxu0 %v1016
    %1474 = vmatprep.subr.bf16.mxu0 %v1013
    %1475 = vmatpush2.bf16.msra.mxu0 %v1012
    %1476 = vmatprep.subr.bf16.mxu0 %v1009
    %1477 = vmatpush2.bf16.msra.mxu0 %v1008
    %1478 = vmatprep.subr.bf16.mxu0 %v1005
    %1479 = vmatpush2.bf16.msra.mxu0 %v1004
    %1480 = vmatprep.subr.bf16.mxu0 %v1001
    %1481 = vmatpush2.bf16.msra.mxu0 %v1000
    %1482 = vmatprep.mubr.bf16.mxu0 %v317
    %1483 = vmatmul.mubr.bf16.gmra.mxu0 %v316
    %v1484 = vpop.f32.mrf.mxu0
    %v1485 = vadd.f32 %v1444, %v1484
    %v1486 = vpop.f32.mrf.mxu0
    %v1487 = vadd.f32 %v1446, %v1486
    %v1488 = vpop.f32.mrf.mxu0
    %v1489 = vpop.f32.mrf.mxu0
    %1490 = vdwg.mxu0
    %1491 = vmatprep.subr.bf16.mxu0 %v1061
    %1492 = vmatpush1.bf16.msra.mxu0 %v1060
    %1493 = vmatprep.subr.bf16.mxu0 %v1057
    %1494 = vmatpush1.bf16.msra.mxu0 %v1056
    %1495 = vmatprep.subr.bf16.mxu0 %v1053
    %1496 = vmatpush1.bf16.msra.mxu0 %v1052
    %1497 = vmatprep.subr.bf16.mxu0 %v1049
    %1498 = vmatpush1.bf16.msra.mxu0 %v1048
    %1499 = vmatprep.subr.bf16.mxu0 %v1045
    %1500 = vmatpush1.bf16.msra.mxu0 %v1044
    %1501 = vmatprep.subr.bf16.mxu0 %v1041
    %1502 = vmatpush1.bf16.msra.mxu0 %v1040
    %1503 = vmatprep.subr.bf16.mxu0 %v1037
    %1504 = vmatpush1.bf16.msra.mxu0 %v1036
    %1505 = vmatprep.subr.bf16.mxu0 %v1033
    %1506 = vmatpush1.bf16.msra.mxu0 %v1032
    %1507 = vmatprep.subr.bf16.mxu0 %v1093
    %1508 = vmatpush2.bf16.msra.mxu0 %v1092
    %1509 = vmatprep.subr.bf16.mxu0 %v1089
    %1510 = vmatpush2.bf16.msra.mxu0 %v1088
    %1511 = vmatprep.subr.bf16.mxu0 %v1085
    %1512 = vmatpush2.bf16.msra.mxu0 %v1084
    %1513 = vmatprep.subr.bf16.mxu0 %v1081
    %1514 = vmatpush2.bf16.msra.mxu0 %v1080
    %1515 = vmatprep.subr.bf16.mxu0 %v1077
    %1516 = vmatpush2.bf16.msra.mxu0 %v1076
    %1517 = vmatprep.subr.bf16.mxu0 %v1073
    %1518 = vmatpush2.bf16.msra.mxu0 %v1072
    %1519 = vmatprep.subr.bf16.mxu0 %v1069
    %1520 = vmatpush2.bf16.msra.mxu0 %v1068
    %1521 = vmatprep.subr.bf16.mxu0 %v1065
    %1522 = vmatpush2.bf16.msra.mxu0 %v1064
    %1523 = vmatprep.mubr.bf16.mxu0 %v319
    %1524 = vmatmul.mubr.bf16.gmra.mxu0 %v318
    %v1525 = vpop.f32.mrf.mxu0
    %v1526 = vadd.f32 %v1485, %v1525
    %v1527 = vpop.f32.mrf.mxu0
    %v1528 = vadd.f32 %v1487, %v1527
    %v1529 = vpop.f32.mrf.mxu0
    %v1530 = vpop.f32.mrf.mxu0
    %1531 = vdwg.mxu0
    %v1532 = vmul.f32 %v1403, 0.5
    %v1533 = vmul.f32 %v1405, 0.5
    %v1534 = vmul.f32 %v1526, 0.5
    %v1535 = vmul.f32 %v1528, 0.5
    %v1536 = vmul.f32 %v1403, %v1403
    %v1537 = vmul.f32 %v1405, %v1405
    %v1538 = vmul.f32 %v1526, %v1526
    %v1539 = vmul.f32 %v1528, %v1528
    %v1540 = vmul.f32 %v1536, %v1403
    %v1541 = vmul.f32 %v1537, %v1405
    %v1542 = vmul.f32 %v1538, %v1526
    %v1543 = vmul.f32 %v1539, %v1528
    %v1544 = vmul.f32 %v1540, 0.044715
    %v1545 = vmul.f32 %v1541, 0.044715
    %v1546 = vmul.f32 %v1542, 0.044715
    %v1547 = vmul.f32 %v1543, 0.044715
    %v1548 = vadd.f32 %v1403, %v1544
    %v1549 = vadd.f32 %v1405, %v1545
    %v1550 = vadd.f32 %v1526, %v1546
    %v1551 = vadd.f32 %v1528, %v1547
    %v1552 = vmul.f32 %v1548, 0.7978846
    %v1553 = vmul.f32 %v1549, 0.7978846
    %v1554 = vmul.f32 %v1550, 0.7978846
    %v1555 = vmul.f32 %v1551, 0.7978846
    %v1556 = vtanh.pop %v1552
    %v1557 = vtanh.pop %v1553
    %v1558 = vtanh.pop %v1554
    %v1559 = vtanh.pop %v1555
    %v1560 = vadd.f32 %v1556, 1.0
    %v1561 = vadd.f32 %v1557, 1.0
    %v1562 = vadd.f32 %v1558, 1.0
    %v1563 = vadd.f32 %v1559, 1.0
    %v1564 = vmul.f32 %v1532, %v1560
    %v1565 = vmul.f32 %v1533, %v1561
    %v1566 = vmul.f32 %v1534, %v1562
    %v1567 = vmul.f32 %v1535, %v1563
    %v1568 = vpack.c.bf16 %v1564, %v1564
    %v1569 = vpack.c.bf16 %v1565, %v1565
    %v1570 = vpack.c.bf16 %v1566, %v1566
    %v1571 = vpack.c.bf16 %v1567, %v1567
    %v1572 = vld [vmem:[#allocation7] sm:$0xff]
    %v1573 = vld [vmem:[#allocation7 + $0x8] sm:$0xff]
    %v1574 = vld [vmem:[#allocation7 + $0x10] sm:$0xff]
    %v1575 = vld [vmem:[#allocation7 + $0x18] sm:$0xff]
    %v1576 = vld [vmem:[#allocation7 + $0x20] sm:$0xff]
    %v1577 = vld [vmem:[#allocation7 + $0x28] sm:$0xff]
    %v1578 = vld [vmem:[#allocation7 + $0x30] sm:$0xff]
    %v1579 = vld [vmem:[#allocation7 + $0x38] sm:$0xff]
    %v1580 = vld [vmem:[#allocation7 + $0x40] sm:$0xff]
    %v1581 = vld [vmem:[#allocation7 + $0x48] sm:$0xff]
    %v1582 = vld [vmem:[#allocation7 + $0x50] sm:$0xff]
    %v1583 = vld [vmem:[#allocation7 + $0x58] sm:$0xff]
    %v1584 = vld [vmem:[#allocation7 + $0x60] sm:$0xff]
    %v1585 = vld [vmem:[#allocation7 + $0x68] sm:$0xff]
    %v1586 = vld [vmem:[#allocation7 + $0x70] sm:$0xff]
    %v1587 = vld [vmem:[#allocation7 + $0x78] sm:$0xff]
    %v1588 = vld [vmem:[#allocation7 + $0x80] sm:$0xff]
    %v1589 = vld [vmem:[#allocation7 + $0x88] sm:$0xff]
    %v1590 = vld [vmem:[#allocation7 + $0x90] sm:$0xff]
    %v1591 = vld [vmem:[#allocation7 + $0x98] sm:$0xff]
    %v1592 = vld [vmem:[#allocation7 + $0xa0] sm:$0xff]
    %v1593 = vld [vmem:[#allocation7 + $0xa8] sm:$0xff]
    %v1594 = vld [vmem:[#allocation7 + $0xb0] sm:$0xff]
    %v1595 = vld [vmem:[#allocation7 + $0xb8] sm:$0xff]
    %v1596 = vld [vmem:[#allocation7 + $0xc0] sm:$0xff]
    %v1597 = vld [vmem:[#allocation7 + $0xc8] sm:$0xff]
    %v1598 = vld [vmem:[#allocation7 + $0xd0] sm:$0xff]
    %v1599 = vld [vmem:[#allocation7 + $0xd8] sm:$0xff]
    %v1600 = vld [vmem:[#allocation7 + $0xe0] sm:$0xff]
    %v1601 = vld [vmem:[#allocation7 + $0xe8] sm:$0xff]
    %v1602 = vld [vmem:[#allocation7 + $0xf0] sm:$0xff]
    %v1603 = vld [vmem:[#allocation7 + $0xf8] sm:$0xff]
    %v1604 = vld [vmem:[#allocation7 + $0x100] sm:$0xff]
    %v1605 = vld [vmem:[#allocation7 + $0x108] sm:$0xff]
    %v1606 = vld [vmem:[#allocation7 + $0x110] sm:$0xff]
    %v1607 = vld [vmem:[#allocation7 + $0x118] sm:$0xff]
    %v1608 = vld [vmem:[#allocation7 + $0x120] sm:$0xff]
    %v1609 = vld [vmem:[#allocation7 + $0x128] sm:$0xff]
    %v1610 = vld [vmem:[#allocation7 + $0x130] sm:$0xff]
    %v1611 = vld [vmem:[#allocation7 + $0x138] sm:$0xff]
    %v1612 = vld [vmem:[#allocation7 + $0x140] sm:$0xff]
    %v1613 = vld [vmem:[#allocation7 + $0x148] sm:$0xff]
    %v1614 = vld [vmem:[#allocation7 + $0x150] sm:$0xff]
    %v1615 = vld [vmem:[#allocation7 + $0x158] sm:$0xff]
    %v1616 = vld [vmem:[#allocation7 + $0x160] sm:$0xff]
    %v1617 = vld [vmem:[#allocation7 + $0x168] sm:$0xff]
    %v1618 = vld [vmem:[#allocation7 + $0x170] sm:$0xff]
    %v1619 = vld [vmem:[#allocation7 + $0x178] sm:$0xff]
    %v1620 = vld [vmem:[#allocation7 + $0x180] sm:$0xff]
    %v1621 = vld [vmem:[#allocation7 + $0x188] sm:$0xff]
    %v1622 = vld [vmem:[#allocation7 + $0x190] sm:$0xff]
    %v1623 = vld [vmem:[#allocation7 + $0x198] sm:$0xff]
    %v1624 = vld [vmem:[#allocation7 + $0x1a0] sm:$0xff]
    %v1625 = vld [vmem:[#allocation7 + $0x1a8] sm:$0xff]
    %v1626 = vld [vmem:[#allocation7 + $0x1b0] sm:$0xff]
    %v1627 = vld [vmem:[#allocation7 + $0x1b8] sm:$0xff]
    %v1628 = vld [vmem:[#allocation7 + $0x1c0] sm:$0xff]
    %v1629 = vld [vmem:[#allocation7 + $0x1c8] sm:$0xff]
    %v1630 = vld [vmem:[#allocation7 + $0x1d0] sm:$0xff]
    %v1631 = vld [vmem:[#allocation7 + $0x1d8] sm:$0xff]
    %v1632 = vld [vmem:[#allocation7 + $0x1e0] sm:$0xff]
    %v1633 = vld [vmem:[#allocation7 + $0x1e8] sm:$0xff]
    %v1634 = vld [vmem:[#allocation7 + $0x1f0] sm:$0xff]
    %v1635 = vld [vmem:[#allocation7 + $0x1f8] sm:$0xff]
    %v1636 = vld [vmem:[%s4] sm:$0x3]
    %v1638 = vlaneseq
    %v1639 = vshrl.u32 %v1638, 7
    %v1640 = vsub.s32 0, %v1639
    %v1641 = vrot.slane %v1636, %v1640
    %v1642 = vlaneseq
    %v1643 = vshrl.u32 %v1642, 7
    %v1644 = vsub.s32 1, %v1643
    %v1645 = vrot.slane %v1636, %v1644
    %v1712 = vunpack.c.l.b16 %v1572
    %v1713 = vunpack.c.h.b16 %v1572
    %v1714 = vunpack.c.l.b16 %v1573
    %v1715 = vunpack.c.h.b16 %v1573
    %v1716 = vunpack.c.l.b16 %v1574
    %v1717 = vunpack.c.h.b16 %v1574
    %v1718 = vunpack.c.l.b16 %v1575
    %v1719 = vunpack.c.h.b16 %v1575
    %v1720 = vunpack.c.l.b16 %v1576
    %v1721 = vunpack.c.h.b16 %v1576
    %v1722 = vunpack.c.l.b16 %v1577
    %v1723 = vunpack.c.h.b16 %v1577
    %v1724 = vunpack.c.l.b16 %v1578
    %v1725 = vunpack.c.h.b16 %v1578
    %v1726 = vunpack.c.l.b16 %v1579
    %v1727 = vunpack.c.h.b16 %v1579
    %v1728 = vunpack.c.l.b16 %v1580
    %v1729 = vunpack.c.h.b16 %v1580
    %v1730 = vunpack.c.l.b16 %v1581
    %v1731 = vunpack.c.h.b16 %v1581
    %v1732 = vunpack.c.l.b16 %v1582
    %v1733 = vunpack.c.h.b16 %v1582
    %v1734 = vunpack.c.l.b16 %v1583
    %v1735 = vunpack.c.h.b16 %v1583
    %v1736 = vunpack.c.l.b16 %v1584
    %v1737 = vunpack.c.h.b16 %v1584
    %v1738 = vunpack.c.l.b16 %v1585
    %v1739 = vunpack.c.h.b16 %v1585
    %v1740 = vunpack.c.l.b16 %v1586
    %v1741 = vunpack.c.h.b16 %v1586
    %v1742 = vunpack.c.l.b16 %v1587
    %v1743 = vunpack.c.h.b16 %v1587
    %v1744 = vunpack.c.l.b16 %v1588
    %v1745 = vunpack.c.h.b16 %v1588
    %v1746 = vunpack.c.l.b16 %v1589
    %v1747 = vunpack.c.h.b16 %v1589
    %v1748 = vunpack.c.l.b16 %v1590
    %v1749 = vunpack.c.h.b16 %v1590
    %v1750 = vunpack.c.l.b16 %v1591
    %v1751 = vunpack.c.h.b16 %v1591
    %v1752 = vunpack.c.l.b16 %v1592
    %v1753 = vunpack.c.h.b16 %v1592
    %v1754 = vunpack.c.l.b16 %v1593
    %v1755 = vunpack.c.h.b16 %v1593
    %v1756 = vunpack.c.l.b16 %v1594
    %v1757 = vunpack.c.h.b16 %v1594
    %v1758 = vunpack.c.l.b16 %v1595
    %v1759 = vunpack.c.h.b16 %v1595
    %v1760 = vunpack.c.l.b16 %v1596
    %v1761 = vunpack.c.h.b16 %v1596
    %v1762 = vunpack.c.l.b16 %v1597
    %v1763 = vunpack.c.h.b16 %v1597
    %v1764 = vunpack.c.l.b16 %v1598
    %v1765 = vunpack.c.h.b16 %v1598
    %v1766 = vunpack.c.l.b16 %v1599
    %v1767 = vunpack.c.h.b16 %v1599
    %v1768 = vunpack.c.l.b16 %v1600
    %v1769 = vunpack.c.h.b16 %v1600
    %v1770 = vunpack.c.l.b16 %v1601
    %v1771 = vunpack.c.h.b16 %v1601
    %v1772 = vunpack.c.l.b16 %v1602
    %v1773 = vunpack.c.h.b16 %v1602
    %v1774 = vunpack.c.l.b16 %v1603
    %v1775 = vunpack.c.h.b16 %v1603
    %v1776 = vunpack.c.l.b16 %v1604
    %v1777 = vunpack.c.h.b16 %v1604
    %v1778 = vunpack.c.l.b16 %v1605
    %v1779 = vunpack.c.h.b16 %v1605
    %v1780 = vunpack.c.l.b16 %v1606
    %v1781 = vunpack.c.h.b16 %v1606
    %v1782 = vunpack.c.l.b16 %v1607
    %v1783 = vunpack.c.h.b16 %v1607
    %v1784 = vunpack.c.l.b16 %v1608
    %v1785 = vunpack.c.h.b16 %v1608
    %v1786 = vunpack.c.l.b16 %v1609
    %v1787 = vunpack.c.h.b16 %v1609
    %v1788 = vunpack.c.l.b16 %v1610
    %v1789 = vunpack.c.h.b16 %v1610
    %v1790 = vunpack.c.l.b16 %v1611
    %v1791 = vunpack.c.h.b16 %v1611
    %v1792 = vunpack.c.l.b16 %v1612
    %v1793 = vunpack.c.h.b16 %v1612
    %v1794 = vunpack.c.l.b16 %v1613
    %v1795 = vunpack.c.h.b16 %v1613
    %v1796 = vunpack.c.l.b16 %v1614
    %v1797 = vunpack.c.h.b16 %v1614
    %v1798 = vunpack.c.l.b16 %v1615
    %v1799 = vunpack.c.h.b16 %v1615
    %v1800 = vunpack.c.l.b16 %v1616
    %v1801 = vunpack.c.h.b16 %v1616
    %v1802 = vunpack.c.l.b16 %v1617
    %v1803 = vunpack.c.h.b16 %v1617
    %v1804 = vunpack.c.l.b16 %v1618
    %v1805 = vunpack.c.h.b16 %v1618
    %v1806 = vunpack.c.l.b16 %v1619
    %v1807 = vunpack.c.h.b16 %v1619
    %v1808 = vunpack.c.l.b16 %v1620
    %v1809 = vunpack.c.h.b16 %v1620
    %v1810 = vunpack.c.l.b16 %v1621
    %v1811 = vunpack.c.h.b16 %v1621
    %v1812 = vunpack.c.l.b16 %v1622
    %v1813 = vunpack.c.h.b16 %v1622
    %v1814 = vunpack.c.l.b16 %v1623
    %v1815 = vunpack.c.h.b16 %v1623
    %v1816 = vunpack.c.l.b16 %v1624
    %v1817 = vunpack.c.h.b16 %v1624
    %v1818 = vunpack.c.l.b16 %v1625
    %v1819 = vunpack.c.h.b16 %v1625
    %v1820 = vunpack.c.l.b16 %v1626
    %v1821 = vunpack.c.h.b16 %v1626
    %v1822 = vunpack.c.l.b16 %v1627
    %v1823 = vunpack.c.h.b16 %v1627
    %v1824 = vunpack.c.l.b16 %v1628
    %v1825 = vunpack.c.h.b16 %v1628
    %v1826 = vunpack.c.l.b16 %v1629
    %v1827 = vunpack.c.h.b16 %v1629
    %v1828 = vunpack.c.l.b16 %v1630
    %v1829 = vunpack.c.h.b16 %v1630
    %v1830 = vunpack.c.l.b16 %v1631
    %v1831 = vunpack.c.h.b16 %v1631
    %v1832 = vunpack.c.l.b16 %v1632
    %v1833 = vunpack.c.h.b16 %v1632
    %v1834 = vunpack.c.l.b16 %v1633
    %v1835 = vunpack.c.h.b16 %v1633
    %v1836 = vunpack.c.l.b16 %v1634
    %v1837 = vunpack.c.h.b16 %v1634
    %v1838 = vunpack.c.l.b16 %v1635
    %v1839 = vunpack.c.h.b16 %v1635
    %v1840 = vpack.c.b16 %v1714, %v1712
    %v1841 = vpack.c.b16 %v1715, %v1713
    %v1842 = vpack.c.b16 %v1718, %v1716
    %v1843 = vpack.c.b16 %v1719, %v1717
    %v1844 = vpack.c.b16 %v1722, %v1720
    %v1845 = vpack.c.b16 %v1723, %v1721
    %v1846 = vpack.c.b16 %v1726, %v1724
    %v1847 = vpack.c.b16 %v1727, %v1725
    %v1848 = vpack.c.b16 %v1730, %v1728
    %v1849 = vpack.c.b16 %v1731, %v1729
    %v1850 = vpack.c.b16 %v1734, %v1732
    %v1851 = vpack.c.b16 %v1735, %v1733
    %v1852 = vpack.c.b16 %v1738, %v1736
    %v1853 = vpack.c.b16 %v1739, %v1737
    %v1854 = vpack.c.b16 %v1742, %v1740
    %v1855 = vpack.c.b16 %v1743, %v1741
    %v1856 = vpack.c.b16 %v1746, %v1744
    %v1857 = vpack.c.b16 %v1747, %v1745
    %v1858 = vpack.c.b16 %v1750, %v1748
    %v1859 = vpack.c.b16 %v1751, %v1749
    %v1860 = vpack.c.b16 %v1754, %v1752
    %v1861 = vpack.c.b16 %v1755, %v1753
    %v1862 = vpack.c.b16 %v1758, %v1756
    %v1863 = vpack.c.b16 %v1759, %v1757
    %v1864 = vpack.c.b16 %v1762, %v1760
    %v1865 = vpack.c.b16 %v1763, %v1761
    %v1866 = vpack.c.b16 %v1766, %v1764
    %v1867 = vpack.c.b16 %v1767, %v1765
    %v1868 = vpack.c.b16 %v1770, %v1768
    %v1869 = vpack.c.b16 %v1771, %v1769
    %v1870 = vpack.c.b16 %v1774, %v1772
    %v1871 = vpack.c.b16 %v1775, %v1773
    %v1872 = vpack.c.b16 %v1778, %v1776
    %v1873 = vpack.c.b16 %v1779, %v1777
    %v1874 = vpack.c.b16 %v1782, %v1780
    %v1875 = vpack.c.b16 %v1783, %v1781
    %v1876 = vpack.c.b16 %v1786, %v1784
    %v1877 = vpack.c.b16 %v1787, %v1785
    %v1878 = vpack.c.b16 %v1790, %v1788
    %v1879 = vpack.c.b16 %v1791, %v1789
    %v1880 = vpack.c.b16 %v1794, %v1792
    %v1881 = vpack.c.b16 %v1795, %v1793
    %v1882 = vpack.c.b16 %v1798, %v1796
    %v1883 = vpack.c.b16 %v1799, %v1797
    %v1884 = vpack.c.b16 %v1802, %v1800
    %v1885 = vpack.c.b16 %v1803, %v1801
    %v1886 = vpack.c.b16 %v1806, %v1804
    %v1887 = vpack.c.b16 %v1807, %v1805
    %v1888 = vpack.c.b16 %v1810, %v1808
    %v1889 = vpack.c.b16 %v1811, %v1809
    %v1890 = vpack.c.b16 %v1814, %v1812
    %v1891 = vpack.c.b16 %v1815, %v1813
    %v1892 = vpack.c.b16 %v1818, %v1816
    %v1893 = vpack.c.b16 %v1819, %v1817
    %v1894 = vpack.c.b16 %v1822, %v1820
    %v1895 = vpack.c.b16 %v1823, %v1821
    %v1896 = vpack.c.b16 %v1826, %v1824
    %v1897 = vpack.c.b16 %v1827, %v1825
    %v1898 = vpack.c.b16 %v1830, %v1828
    %v1899 = vpack.c.b16 %v1831, %v1829
    %v1900 = vpack.c.b16 %v1834, %v1832
    %v1901 = vpack.c.b16 %v1835, %v1833
    %v1902 = vpack.c.b16 %v1838, %v1836
    %v1903 = vpack.c.b16 %v1839, %v1837
    %1968 = vmatprep.subr.bf16.mxu0 %v1855
    %1969 = vmatpush1.bf16.msra.mxu0 %v1854
    %1970 = vmatprep.subr.bf16.mxu0 %v1853
    %1971 = vmatpush1.bf16.msra.mxu0 %v1852
    %1972 = vmatprep.subr.bf16.mxu0 %v1851
    %1973 = vmatpush1.bf16.msra.mxu0 %v1850
    %1974 = vmatprep.subr.bf16.mxu0 %v1849
    %1975 = vmatpush1.bf16.msra.mxu0 %v1848
    %1976 = vmatprep.subr.bf16.mxu0 %v1847
    %1977 = vmatpush1.bf16.msra.mxu0 %v1846
    %1978 = vmatprep.subr.bf16.mxu0 %v1845
    %1979 = vmatpush1.bf16.msra.mxu0 %v1844
    %1980 = vmatprep.subr.bf16.mxu0 %v1843
    %1981 = vmatpush1.bf16.msra.mxu0 %v1842
    %1982 = vmatprep.subr.bf16.mxu0 %v1841
    %1983 = vmatpush1.bf16.msra.mxu0 %v1840
    %1984 = vmatprep.subr.bf16.mxu0 %v1871
    %1985 = vmatpush2.bf16.msra.mxu0 %v1870
    %1986 = vmatprep.subr.bf16.mxu0 %v1869
    %1987 = vmatpush2.bf16.msra.mxu0 %v1868
    %1988 = vmatprep.subr.bf16.mxu0 %v1867
    %1989 = vmatpush2.bf16.msra.mxu0 %v1866
    %1990 = vmatprep.subr.bf16.mxu0 %v1865
    %1991 = vmatpush2.bf16.msra.mxu0 %v1864
    %1992 = vmatprep.subr.bf16.mxu0 %v1863
    %1993 = vmatpush2.bf16.msra.mxu0 %v1862
    %1994 = vmatprep.subr.bf16.mxu0 %v1861
    %1995 = vmatpush2.bf16.msra.mxu0 %v1860
    %1996 = vmatprep.subr.bf16.mxu0 %v1859
    %1997 = vmatpush2.bf16.msra.mxu0 %v1858
    %1998 = vmatprep.subr.bf16.mxu0 %v1857
    %1999 = vmatpush2.bf16.msra.mxu0 %v1856
    %2000 = vmatprep.mubr.bf16.mxu0 %v1569
    %2001 = vmatmul.mubr.bf16.gmra.mxu0 %v1568
    %v2002 = vpop.f32.mrf.mxu0
    %v2003 = vadd.f32 %v1641, %v2002
    %v2004 = vpop.f32.mrf.mxu0
    %v2005 = vadd.f32 %v1645, %v2004
    %v2006 = vpop.f32.mrf.mxu0
    %v2007 = vpop.f32.mrf.mxu0
    %2008 = vdwg.mxu0
    %2009 = vmatprep.subr.bf16.mxu0 %v1887
    %2010 = vmatpush1.bf16.msra.mxu0 %v1886
    %2011 = vmatprep.subr.bf16.mxu0 %v1885
    %2012 = vmatpush1.bf16.msra.mxu0 %v1884
    %2013 = vmatprep.subr.bf16.mxu0 %v1883
    %2014 = vmatpush1.bf16.msra.mxu0 %v1882
    %2015 = vmatprep.subr.bf16.mxu0 %v1881
    %2016 = vmatpush1.bf16.msra.mxu0 %v1880
    %2017 = vmatprep.subr.bf16.mxu0 %v1879
    %2018 = vmatpush1.bf16.msra.mxu0 %v1878
    %2019 = vmatprep.subr.bf16.mxu0 %v1877
    %2020 = vmatpush1.bf16.msra.mxu0 %v1876
    %2021 = vmatprep.subr.bf16.mxu0 %v1875
    %2022 = vmatpush1.bf16.msra.mxu0 %v1874
    %2023 = vmatprep.subr.bf16.mxu0 %v1873
    %2024 = vmatpush1.bf16.msra.mxu0 %v1872
    %2025 = vmatprep.subr.bf16.mxu0 %v1903
    %2026 = vmatpush2.bf16.msra.mxu0 %v1902
    %2027 = vmatprep.subr.bf16.mxu0 %v1901
    %2028 = vmatpush2.bf16.msra.mxu0 %v1900
    %2029 = vmatprep.subr.bf16.mxu0 %v1899
    %2030 = vmatpush2.bf16.msra.mxu0 %v1898
    %2031 = vmatprep.subr.bf16.mxu0 %v1897
    %2032 = vmatpush2.bf16.msra.mxu0 %v1896
    %2033 = vmatprep.subr.bf16.mxu0 %v1895
    %2034 = vmatpush2.bf16.msra.mxu0 %v1894
    %2035 = vmatprep.subr.bf16.mxu0 %v1893
    %2036 = vmatpush2.bf16.msra.mxu0 %v1892
    %2037 = vmatprep.subr.bf16.mxu0 %v1891
    %2038 = vmatpush2.bf16.msra.mxu0 %v1890
    %2039 = vmatprep.subr.bf16.mxu0 %v1889
    %2040 = vmatpush2.bf16.msra.mxu0 %v1888
    %2041 = vmatprep.mubr.bf16.mxu0 %v1571
    %2042 = vmatmul.mubr.bf16.gmra.mxu0 %v1570
    %v2043 = vpop.f32.mrf.mxu0
    %v2044 = vadd.f32 %v2003, %v2043
    %v2045 = vpop.f32.mrf.mxu0
    %v2046 = vadd.f32 %v2005, %v2045
    %v2047 = vpop.f32.mrf.mxu0
    %v2048 = vpop.f32.mrf.mxu0
    %2049 = vdwg.mxu0
    %v2050 = vmul.f32 %v2044, 0.5
    %v2051 = vmul.f32 %v2046, 0.5
    %v2052 = vmul.f32 %v2044, %v2044
    %v2053 = vmul.f32 %v2046, %v2046
    %v2054 = vmul.f32 %v2052, %v2044
    %v2055 = vmul.f32 %v2053, %v2046
    %v2056 = vmul.f32 %v2054, 0.044715
    %v2057 = vmul.f32 %v2055, 0.044715
    %v2058 = vadd.f32 %v2044, %v2056
    %v2059 = vadd.f32 %v2046, %v2057
    %v2060 = vmul.f32 %v2058, 0.7978846
    %v2061 = vmul.f32 %v2059, 0.7978846
    %v2062 = vtanh.pop %v2060
    %v2063 = vtanh.pop %v2061
    %v2064 = vadd.f32 %v2062, 1.0
    %v2065 = vadd.f32 %v2063, 1.0
    %v2066 = vmul.f32 %v2050, %v2064
    %v2067 = vmul.f32 %v2051, %v2065
    %v2068 = vpack.c.bf16 %v2066, %v2066
    %v2069 = vpack.c.bf16 %v2067, %v2067
    %v2070 = vld [vmem:[#allocation8] sm:$0xf]
    %v2071 = vld [vmem:[#allocation8 + $0x4] sm:$0xf]
    %v2072 = vld [vmem:[#allocation8 + $0x8] sm:$0xf]
    %v2073 = vld [vmem:[#allocation8 + $0xc] sm:$0xf]
    %v2074 = vld [vmem:[#allocation8 + $0x10] sm:$0xf]
    %v2075 = vld [vmem:[#allocation8 + $0x14] sm:$0xf]
    %v2076 = vld [vmem:[#allocation8 + $0x18] sm:$0xf]
    %v2077 = vld [vmem:[#allocation8 + $0x1c] sm:$0xf]
    %v2078 = vld [vmem:[#allocation8 + $0x20] sm:$0xf]
    %v2079 = vld [vmem:[#allocation8 + $0x24] sm:$0xf]
    %v2080 = vld [vmem:[#allocation8 + $0x28] sm:$0xf]
    %v2081 = vld [vmem:[#allocation8 + $0x2c] sm:$0xf]
    %v2082 = vld [vmem:[#allocation8 + $0x30] sm:$0xf]
    %v2083 = vld [vmem:[#allocation8 + $0x34] sm:$0xf]
    %v2084 = vld [vmem:[#allocation8 + $0x38] sm:$0xf]
    %v2085 = vld [vmem:[#allocation8 + $0x3c] sm:$0xf]
    %v2086 = vld [vmem:[#allocation8 + $0x40] sm:$0xf]
    %v2087 = vld [vmem:[#allocation8 + $0x44] sm:$0xf]
    %v2088 = vld [vmem:[#allocation8 + $0x48] sm:$0xf]
    %v2089 = vld [vmem:[#allocation8 + $0x4c] sm:$0xf]
    %v2090 = vld [vmem:[#allocation8 + $0x50] sm:$0xf]
    %v2091 = vld [vmem:[#allocation8 + $0x54] sm:$0xf]
    %v2092 = vld [vmem:[#allocation8 + $0x58] sm:$0xf]
    %v2093 = vld [vmem:[#allocation8 + $0x5c] sm:$0xf]
    %v2094 = vld [vmem:[#allocation8 + $0x60] sm:$0xf]
    %v2095 = vld [vmem:[#allocation8 + $0x64] sm:$0xf]
    %v2096 = vld [vmem:[#allocation8 + $0x68] sm:$0xf]
    %v2097 = vld [vmem:[#allocation8 + $0x6c] sm:$0xf]
    %v2098 = vld [vmem:[#allocation8 + $0x70] sm:$0xf]
    %v2099 = vld [vmem:[#allocation8 + $0x74] sm:$0xf]
    %v2100 = vld [vmem:[#allocation8 + $0x78] sm:$0xf]
    %v2101 = vld [vmem:[#allocation8 + $0x7c] sm:$0xf]
    %v2102 = vld [vmem:[%s6] sm:$0x1]
    %v2104 = vlaneseq
    %v2105 = vshrl.u32 %v2104, 7
    %v2106 = vsub.s32 0, %v2105
    %v2107 = vrot.slane %v2102, %v2106
    %v2141 = vunpack.c.l.b16 %v2070
    %v2142 = vunpack.c.l.b16 %v2071
    %v2143 = vunpack.c.l.b16 %v2072
    %v2144 = vunpack.c.l.b16 %v2073
    %v2145 = vunpack.c.l.b16 %v2074
    %v2146 = vunpack.c.l.b16 %v2075
    %v2147 = vunpack.c.l.b16 %v2076
    %v2148 = vunpack.c.l.b16 %v2077
    %v2149 = vunpack.c.l.b16 %v2078
    %v2150 = vunpack.c.l.b16 %v2079
    %v2151 = vunpack.c.l.b16 %v2080
    %v2152 = vunpack.c.l.b16 %v2081
    %v2153 = vunpack.c.l.b16 %v2082
    %v2154 = vunpack.c.l.b16 %v2083
    %v2155 = vunpack.c.l.b16 %v2084
    %v2156 = vunpack.c.l.b16 %v2085
    %v2157 = vunpack.c.l.b16 %v2086
    %v2158 = vunpack.c.l.b16 %v2087
    %v2159 = vunpack.c.l.b16 %v2088
    %v2160 = vunpack.c.l.b16 %v2089
    %v2161 = vunpack.c.l.b16 %v2090
    %v2162 = vunpack.c.l.b16 %v2091
    %v2163 = vunpack.c.l.b16 %v2092
    %v2164 = vunpack.c.l.b16 %v2093
    %v2165 = vunpack.c.l.b16 %v2094
    %v2166 = vunpack.c.l.b16 %v2095
    %v2167 = vunpack.c.l.b16 %v2096
    %v2168 = vunpack.c.l.b16 %v2097
    %v2169 = vunpack.c.l.b16 %v2098
    %v2170 = vunpack.c.l.b16 %v2099
    %v2171 = vunpack.c.l.b16 %v2100
    %v2172 = vunpack.c.l.b16 %v2101
    %v2173 = vpack.c.b16 %v2142, %v2141
    %v2174 = vpack.c.b16 %v2144, %v2143
    %v2175 = vpack.c.b16 %v2146, %v2145
    %v2176 = vpack.c.b16 %v2148, %v2147
    %v2177 = vpack.c.b16 %v2150, %v2149
    %v2178 = vpack.c.b16 %v2152, %v2151
    %v2179 = vpack.c.b16 %v2154, %v2153
    %v2180 = vpack.c.b16 %v2156, %v2155
    %v2181 = vpack.c.b16 %v2158, %v2157
    %v2182 = vpack.c.b16 %v2160, %v2159
    %v2183 = vpack.c.b16 %v2162, %v2161
    %v2184 = vpack.c.b16 %v2164, %v2163
    %v2185 = vpack.c.b16 %v2166, %v2165
    %v2186 = vpack.c.b16 %v2168, %v2167
    %v2187 = vpack.c.b16 %v2170, %v2169
    %v2188 = vpack.c.b16 %v2172, %v2171
    %2205 = vmatprep.subr.bf16.mxu0 0
    %2206 = vmatpush1.bf16.msra.mxu0 %v2180
    %2207 = vmatprep.subr.bf16.mxu0 0
    %2208 = vmatpush1.bf16.msra.mxu0 %v2179
    %2209 = vmatprep.subr.bf16.mxu0 0
    %2210 = vmatpush1.bf16.msra.mxu0 %v2178
    %2211 = vmatprep.subr.bf16.mxu0 0
    %2212 = vmatpush1.bf16.msra.mxu0 %v2177
    %2213 = vmatprep.subr.bf16.mxu0 0
    %2214 = vmatpush1.bf16.msra.mxu0 %v2176
    %2215 = vmatprep.subr.bf16.mxu0 0
    %2216 = vmatpush1.bf16.msra.mxu0 %v2175
    %2217 = vmatprep.subr.bf16.mxu0 0
    %2218 = vmatpush1.bf16.msra.mxu0 %v2174
    %2219 = vmatprep.subr.bf16.mxu0 0
    %2220 = vmatpush1.bf16.msra.mxu0 %v2173
    %2221 = vmatprep.subr.bf16.mxu0 0
    %2222 = vmatpush2.bf16.msra.mxu0 %v2188
    %2223 = vmatprep.subr.bf16.mxu0 0
    %2224 = vmatpush2.bf16.msra.mxu0 %v2187
    %2225 = vmatprep.subr.bf16.mxu0 0
    %2226 = vmatpush2.bf16.msra.mxu0 %v2186
    %2227 = vmatprep.subr.bf16.mxu0 0
    %2228 = vmatpush2.bf16.msra.mxu0 %v2185
    %2229 = vmatprep.subr.bf16.mxu0 0
    %2230 = vmatpush2.bf16.msra.mxu0 %v2184
    %2231 = vmatprep.subr.bf16.mxu0 0
    %2232 = vmatpush2.bf16.msra.mxu0 %v2183
    %2233 = vmatprep.subr.bf16.mxu0 0
    %2234 = vmatpush2.bf16.msra.mxu0 %v2182
    %2235 = vmatprep.subr.bf16.mxu0 0
    %2236 = vmatpush2.bf16.msra.mxu0 %v2181
    %2237 = vmatprep.mubr.bf16.mxu0 %v2069
    %2238 = vmatmul.mubr.bf16.gmra.mxu0 %v2068
    %v2239 = vpop.f32.mrf.mxu0
    %v2240 = vadd.f32 %v2107, %v2239
    %v2241 = vpop.f32.mrf.mxu0
    %v2242 = vpop.f32.mrf.mxu0
    %v2243 = vpop.f32.mrf.mxu0
    %2244 = vdwg.mxu0
    %v2245 = vmul.f32 %v2240, 0.5
    %v2246 = vmul.f32 %v2240, %v2240
    %v2247 = vmul.f32 %v2246, %v2240
    %v2248 = vmul.f32 %v2247, 0.044715
    %v2249 = vadd.f32 %v2240, %v2248
    %v2250 = vmul.f32 %v2249, 0.7978846
    %v2251 = vtanh.pop %v2250
    %v2252 = vadd.f32 %v2251, 1.0
    %v2253 = vmul.f32 %v2245, %v2252
    %v2254 = vld [vmem:[%s7] sm:$0x1]
    %v2256 = vlaneseq
    %v2257 = vshrl.u32 %v2256, 7
    %v2258 = vsub.s32 0, %v2257
    %v2259 = vrot.slane %v2254, %v2258
    %v2261 = vmul.f32 %v2253, %v2259
    %2262 = vadd.xlane.f32.xlu0 %v2261
    %v2263 = vpop.xlane.xlu0 %2262
    %v2264 = vld [vmem:[#allocation2] sm:$0x1]
    %v2266 = vlaneseq
    %v2267 = vshrl.u32 %v2266, 7
    %v2268 = vsub.s32 0, %v2267
    %v2269 = vrot.slane %v2264, %v2268
    %v2271 = vadd.f32 %v2263, %v2269
    %vm2272 = vcmask 7168
    %2273 = vst.msk [vmem:[%s9] sm:$0xff] %vm2272, %v2271
    // Predicated region
    $region54: #{tpu_custom_call.1} parent=1 // pred_check
      _
    $region55: #{tpu_custom_call.1} parent=1 // pred_check_branch
      %2275 = sbr.rel (0) target = $region57
    $region56: #{tpu_custom_call.1} parent=1 // pred_region
      _
    $region57: #{tpu_custom_call.1} parent=1 // pred_fallthru
      _
    // Predicated region
    $region58: #{tpu_custom_call.1} parent=1 // pred_check
      _
    $region59: #{tpu_custom_call.1} parent=1 // pred_check_branch
      %2277 = sbr.rel (0) target = $region61
    $region60: #{tpu_custom_call.1} parent=1 // pred_region
      _
    $region61: #{tpu_custom_call.1} parent=1 // pred_fallthru
      _
    %2278 = vsyncpa [#allocation4], 1
    %2279 = vsyncpa [#allocation6], 1
    %2280 = vsyncpa [#allocation9], 1

</llo_original>
